<compile_context>
chip_gen: v7x
topology: tpu7x:2x2x1
jax: 0.10.0
libtpu: 0.0.40
codegen_flags: <defaults>
</compile_context>

<pallas_src>
import functools

import jax
import jax.numpy as jnp
import numpy as np
from jax import lax
from jax.experimental import pallas as pl
from jax.experimental.pallas import tpu as pltpu

_VMEM_LIMIT = 32 * 1024 * 1024  # safe on v5e/v6e (128 MiB VMEM) and v7x (64 MiB)


def _round_up(n, m):
    return ((n + m - 1) // m) * m


def _vmem_estimate(t_chunk, b_blk, h_pad):
    """Rough per-pallas_call VMEM use (f32, default double-buffered blocks)."""
    blk = t_chunk * b_blk * h_pad * 4
    w = h_pad * h_pad * 4
    return (2 * blk          # xproj input (double-buffered)
            + 2 * blk        # output block (double-buffered)
            + 2 * 2 * w      # W_hh^T + W_ih_next^T (double-buffered)
            + blk            # hbuf scratch
            + b_blk * h_pad * 4)  # h scratch


def _pick_time_chunk(T, b_blk, h_pad):
    """Largest time chunk that fits the VMEM budget (amortizes ~0.35us/grid step)."""
    budget = 20 * 1024 * 1024
    t_cap = _round_up(T, 8)
    for c in (128, 64, 32, 16, 8):
        if c <= t_cap and _vmem_estimate(c, b_blk, h_pad) <= budget:
            return c, _round_up(T, c)
    return 8, _round_up(T, 8)


# ----------------------------------------------------------------------------
# Kernel 1: one Elman-RNN layer (tanh) over a chunk of timesteps, with the NEXT
# layer's input projection fused in the epilogue (one big MXU matmul per chunk).
# The hidden state is carried in vregs inside the loop; h_ref is only the
# chunk-to-chunk carry.
# ----------------------------------------------------------------------------
def _rnn_mid_kernel(xproj_ref, whhT_ref, wnextT_ref, bnext_ref, xnext_ref,
                    h_ref, hbuf_ref, *, t_chunk, unroll):
    # xproj_ref : (t_chunk, B, H)  this layer's x @ W_ih.T + (b_ih + b_hh)
    # whhT_ref  : (H, H)           this layer's W_hh, pre-transposed
    # wnextT_ref: (H, H)           next layer's W_ih, pre-transposed
    # bnext_ref : (1, H)           next layer's (b_ih + b_hh)
    # xnext_ref : (t_chunk, B, H)  next layer's input projection (output)
    # h_ref     : (B, H)           chunk-to-chunk hidden-state carry (VMEM scratch)
    # hbuf_ref  : (t_chunk, B, H)  chunk hidden-state buffer (VMEM scratch)
    @pl.when(pl.program_id(1) == 0)          # time axis is grid axis 1
    def _():
        h_ref[...] = jnp.zeros_like(h_ref)   # h0 = zeros (matches torch.zeros)

    def step(i, h):
        h_new = jnp.tanh(
            xproj_ref[i]
            + jnp.dot(h, whhT_ref[...], preferred_element_type=jnp.float32)
        )
        hbuf_ref[i] = h_new                  # off the serial dependency chain
        return h_new                         # h stays in vregs across steps

    h_final = lax.fori_loop(0, t_chunk, step, h_ref[...], unroll=unroll)
    h_ref[...] = h_final                     # single carry write per chunk

    # Fused next-layer input projection for the whole chunk (one MXU matmul).
    b, h_dim = h_ref.shape
    hb = hbuf_ref[...].reshape(t_chunk * b, h_dim)
    xn = jnp.dot(hb, wnextT_ref[...], preferred_element_type=jnp.float32)
    xn = xn + bnext_ref[...]
    xnext_ref[...] = xn.reshape(t_chunk, b, h_dim)


# ----------------------------------------------------------------------------
# Kernel 2: last RNN layer with Linear(hidden_size, 1) fused in.  The FC is done
# once per chunk from the buffered hidden states (not per timestep) and stored as
# a (t_chunk, B) block; FC bias is folded in by the wrapper.
# ----------------------------------------------------------------------------
def _rnn_last_kernel(xproj_ref, whhT_ref, wfc_ref, y_ref,
                     h_ref, hbuf_ref, *, t_chunk, unroll):
    # wfc_ref : (1, H)        fc weight row, zero-padded to H_pad
    # y_ref   : (t_chunk, B)  fc output for this chunk (time-major)
    @pl.when(pl.program_id(1) == 0)
    def _():
        h_ref[...] = jnp.zeros_like(h_ref)

    def step(i, h):
        h_new = jnp.tanh(
            xproj_ref[i]
            + jnp.dot(h, whhT_ref[...], preferred_element_type=jnp.float32)
        )
        hbuf_ref[i] = h_new
        return h_new

    h_final = lax.fori_loop(0, t_chunk, step, h_ref[...], unroll=unroll)
    h_ref[...] = h_final

    # Fused Linear(H, 1) for the whole chunk at once (padded lanes are zero).
    y_ref[...] = jnp.sum(hbuf_ref[...] * wfc_ref[...], axis=-1)   # (t_chunk, B)


# ----------------------------------------------------------------------------
# pallas_call wrappers
# ----------------------------------------------------------------------------
def _rnn_mid_layer(xproj, w_hh_T, w_ih_next_T, bias_next, *, t_chunk, b_blk, unroll):
    """xproj: (T, B, H) time-major, padded.  Returns next layer's xproj (T, B, H)."""
    T, B, H = xproj.shape
    kernel = functools.partial(_rnn_mid_kernel, t_chunk=t_chunk, unroll=unroll)
    cost = pl.CostEstimate(
        flops=int(4 * T * B * H * H),
        transcendentals=int(T * B * H),
        bytes_accessed=int(4 * (2 * T * B * H + 2 * H * H + H)),
    )
    return pl.pallas_call(
        kernel,
        out_shape=jax.ShapeDtypeStruct((T, B, H), jnp.float32),
        grid_spec=pltpu.PrefetchScalarGridSpec(
            num_scalar_prefetch=0,
            grid=(B // b_blk, T // t_chunk),
            in_specs=[
                pl.BlockSpec((t_chunk, b_blk, H), lambda b, c: (c, b, 0)),
                pl.BlockSpec((H, H), lambda b, c: (0, 0)),
                pl.BlockSpec((H, H), lambda b, c: (0, 0)),
                pl.BlockSpec((1, H), lambda b, c: (0, 0)),
            ],
            out_specs=pl.BlockSpec((t_chunk, b_blk, H), lambda b, c: (c, b, 0)),
            scratch_shapes=[
                pltpu.VMEM((b_blk, H), jnp.float32),
                pltpu.VMEM((t_chunk, b_blk, H), jnp.float32),
            ],
        ),
        compiler_params=pltpu.CompilerParams(
            dimension_semantics=("parallel", "arbitrary"),
            vmem_limit_bytes=_VMEM_LIMIT,
        ),
        cost_estimate=cost,
    )(xproj, w_hh_T, w_ih_next_T, bias_next)


def _rnn_last_layer(xproj, w_hh_T, w_fc, *, t_chunk, b_blk, unroll):
    """Last layer: recurrence + fused FC.  Returns (T, B) (FC bias NOT added)."""
    T, B, H = xproj.shape
    kernel = functools.partial(_rnn_last_kernel, t_chunk=t_chunk, unroll=unroll)
    cost = pl.CostEstimate(
        flops=int(2 * T * B * H * H + 2 * T * B * H),
        transcendentals=int(T * B * H),
        bytes_accessed=int(4 * (T * B * H + T * B + H * H + H)),
    )
    return pl.pallas_call(
        kernel,
        out_shape=jax.ShapeDtypeStruct((T, B), jnp.float32),
        grid_spec=pltpu.PrefetchScalarGridSpec(
            num_scalar_prefetch=0,
            grid=(B // b_blk, T // t_chunk),
            in_specs=[
                pl.BlockSpec((t_chunk, b_blk, H), lambda b, c: (c, b, 0)),
                pl.BlockSpec((H, H), lambda b, c: (0, 0)),
                pl.BlockSpec((1, H), lambda b, c: (0, 0)),
            ],
            out_specs=pl.BlockSpec((t_chunk, b_blk), lambda b, c: (c, b)),
            scratch_shapes=[
                pltpu.VMEM((b_blk, H), jnp.float32),
                pltpu.VMEM((t_chunk, b_blk, H), jnp.float32),
            ],
        ),
        compiler_params=pltpu.CompilerParams(
            dimension_semantics=("parallel", "arbitrary"),
            vmem_limit_bytes=_VMEM_LIMIT,
        ),
        cost_estimate=cost,
    )(xproj, w_hh_T, w_fc)


# ----------------------------------------------------------------------------
# Full module forward
# ----------------------------------------------------------------------------
@functools.partial(jax.jit, static_argnames=("num_layers",))
def rnn_forward(x, params, num_layers):
    """x: (B, T, input_size) batch-first, like the PyTorch module.  Returns (B, T, 1)."""
    B, T, D = x.shape
    H = params["w_hh_0"].shape[0]
    H_pad = _round_up(H, 128)                     # lane multiple

    # batch padding: >=2 blocks of >=8 rows when B is large enough (v7x megacore)
    B_pad = _round_up(B, 8)
    if B_pad >= 16:
        B_pad = _round_up(B, 16)
        B_blk = B_pad // 2
    else:
        B_blk = B_pad

    t_chunk, T_pad = _pick_time_chunk(T, B_blk, H_pad)
    unroll = True if t_chunk <= 16 else 8

    # time-major, pad batch (sublanes) and time (chunk multiple)
    x_tm = jnp.transpose(x, (1, 0, 2)).astype(jnp.float32)            # (T, B, D)
    x_tm = jnp.pad(x_tm, ((0, T_pad - T), (0, B_pad - B), (0, 0)))    # (T_pad, B_pad, D)

    def layer_weights(layer, d_in, d_in_pad):
        w_ih = params[f"w_ih_{layer}"].astype(jnp.float32)            # (H, d_in)
        w_hh = params[f"w_hh_{layer}"].astype(jnp.float32)            # (H, H)
        bias = (params[f"b_ih_{layer}"] + params[f"b_hh_{layer}"]).astype(jnp.float32)
        w_ih_T = jnp.pad(w_ih.T, ((0, d_in_pad - d_in), (0, H_pad - H)))
        w_hh_T = jnp.pad(w_hh.T, ((0, H_pad - H), (0, H_pad - H)))
        bias_p = jnp.pad(bias, (0, H_pad - H)).reshape(1, H_pad)
        return w_ih_T, w_hh_T, bias_p

    # Layer-0 input projection hoisted out of the recurrence: one big MXU matmul
    # over all timesteps at once (handled by XLA).
    w_ih0_T, w_hh_T_cur, bias0 = layer_weights(0, D, D)
    xproj = (
        jnp.einsum("tbk,kh->tbh", x_tm, w_ih0_T,
                   preferred_element_type=jnp.float32)
        + bias0
    )                                                                 # (T_pad, B_pad, H_pad)

    # Intermediate layers: recurrence + fused next-layer input projection
    # (raw hidden states never touch HBM between layers).
    for layer in range(num_layers - 1):
        w_ih_next_T, w_hh_next_T, bias_next = layer_weights(layer + 1, H, H_pad)
        xproj = _rnn_mid_layer(xproj, w_hh_T_cur, w_ih_next_T, bias_next,
                               t_chunk=t_chunk, b_blk=B_blk, unroll=unroll)
        w_hh_T_cur = w_hh_next_T

    # Last layer: recurrence + fused Linear(H, 1)
    w_fc = jnp.pad(params["w_fc"].astype(jnp.float32), ((0, 0), (0, H_pad - H)))
    y_tb = _rnn_last_layer(xproj, w_hh_T_cur, w_fc,
                           t_chunk=t_chunk, b_blk=B_blk, unroll=unroll)  # (T_pad, B_pad)

    y = jnp.transpose(y_tb[:T, :B])[..., None]        # strip pads -> (B, T, 1)
    y = y + params["b_fc"].astype(jnp.float32)        # fold FC bias in
    return y


# ----------------------------------------------------------------------------
# Pure-JAX reference (for correctness check only)
# ----------------------------------------------------------------------------
def rnn_forward_ref(x, params, num_layers):
    B, T, _ = x.shape
    h_seq = x.astype(jnp.float32)
    for layer in range(num_layers):
        w_ih = params[f"w_ih_{layer}"]
        w_hh = params[f"w_hh_{layer}"]
        b = params[f"b_ih_{layer}"] + params[f"b_hh_{layer}"]
        H = w_ih.shape[0]
        h = jnp.zeros((B, H), jnp.float32)
        outs = []
        for t in range(T):
            h = jnp.tanh(h_seq[:, t, :] @ w_ih.T + h @ w_hh.T + b)
            outs.append(h)
        h_seq = jnp.stack(outs, axis=1)  # (B, T, H)
    return h_seq @ params["w_fc"].T + params["b_fc"]  # (B, T, 1)


# ----------------------------------------------------------------------------
# Deterministic parameter init (PyTorch-style uniform(-1/sqrt(H), 1/sqrt(H)))
# ----------------------------------------------------------------------------
def init_params(key, input_size, hidden_size, num_layers):
    params = {}
    bound = 1.0 / np.sqrt(hidden_size)
    for layer in range(num_layers):
        d_in = input_size if layer == 0 else hidden_size
        for name, shape in [
            (f"w_ih_{layer}", (hidden_size, d_in)),
            (f"w_hh_{layer}", (hidden_size, hidden_size)),
            (f"b_ih_{layer}", (hidden_size,)),
            (f"b_hh_{layer}", (hidden_size,)),
        ]:
            key, sub = jax.random.split(key)
            params[name] = jax.random.uniform(
                sub, shape, jnp.float32, minval=-bound, maxval=bound
            )
    key, sub = jax.random.split(key)
    params["w_fc"] = jax.random.uniform(
        sub, (1, hidden_size), jnp.float32, minval=-bound, maxval=bound
    )
    key, sub = jax.random.split(key)
    params["b_fc"] = jax.random.uniform(
        sub, (1,), jnp.float32, minval=-bound, maxval=bound
    )
    return params


if __name__ == "__main__":
    batch, seq, input_size, hidden_size, num_layers = 2, 8, 16, 32, 2

    key = jax.random.PRNGKey(0)
    key, xk = jax.random.split(key)
    x = jax.random.normal(xk, (batch, seq, input_size), jnp.float32)
    params = init_params(key, input_size, hidden_size, num_layers)

    out = rnn_forward(x, params, num_layers)
    out = jax.block_until_ready(out)

    ref = rnn_forward_ref(x, params, num_layers)
    assert out.shape == (batch, seq, 1)
    np.testing.assert_allclose(np.asarray(out), np.asarray(ref), rtol=1e-4, atol=1e-4)

    print("KERNEL_OK")
</pallas_src>

<mosaic_0001>
module attributes {stable_mosaic.version = 11 : i64} {
  func.func @_rnn_last_kernel(%arg0: i32, %arg1: i32, %arg2: memref<8x8x128xf32, #tpu.memory_space<vmem>>, %arg3: memref<128x128xf32, #tpu.memory_space<vmem>>, %arg4: memref<1x128xf32, #tpu.memory_space<vmem>>, %arg5: memref<8x8xf32, #tpu.memory_space<vmem>>, %arg6: memref<8x128xf32, #tpu.memory_space<vmem>>, %arg7: memref<8x8x128xf32, #tpu.memory_space<vmem>>) attributes {dimension_semantics = [#tpu.dimension_semantics<parallel>, #tpu.dimension_semantics<arbitrary>], iteration_bounds = array<i64: 1, 1>, scalar_prefetch = 0 : i64, scratch_operands = 2 : i64, tpu.core_type = #tpu.core_type<tc>, window_params = [{transform_indices = @transform_0, window_bounds = array<i64: 8, 8, 128>}, {pipeline_mode = #tpu.pipeline_mode<synchronous>, transform_indices = @transform_1, window_bounds = array<i64: 128, 128>}, {pipeline_mode = #tpu.pipeline_mode<synchronous>, transform_indices = @transform_2, window_bounds = array<i64: 1, 128>}, {transform_indices = @transform_3, window_bounds = array<i64: 8, 8>}]} {
    %c0_i32 = arith.constant 0 : i32
    %0 = arith.cmpi eq, %arg1, %c0_i32 : i32
    %1 = arith.extui %0 : i1 to i32
    %c0_i32_0 = arith.constant 0 : i32
    %2 = arith.cmpi ne, %1, %c0_i32_0 : i32
    scf.if %2 {
      %cst_68 = arith.constant 0.000000e+00 : f32
      %100 = vector.broadcast %cst_68 : f32 to vector<8x128xf32>
      %c0_69 = arith.constant 0 : index
      %c0_70 = arith.constant 0 : index
      %101 = vector.load %arg6[%c0_69, %c0_70] : memref<8x128xf32, #tpu.memory_space<vmem>>, vector<8x128xf32>
      tpu.vector_store %arg6[%c0_69, %c0_70], %100 {strides = array<i32>} : memref<8x128xf32, #tpu.memory_space<vmem>>, vector<8x128xf32>,
    } else {
    }
    %c0 = arith.constant 0 : index
    %c0_1 = arith.constant 0 : index
    %3 = vector.load %arg6[%c0, %c0_1] : memref<8x128xf32, #tpu.memory_space<vmem>>, vector<8x128xf32>
    %c0_i32_2 = arith.constant 0 : i32
    %4 = arith.index_cast %c0_i32_2 : i32 to index
    %c0_3 = arith.constant 0 : index
    %c0_4 = arith.constant 0 : index
    %5 = vector.load %arg2[%4, %c0_3, %c0_4] : memref<8x8x128xf32, #tpu.memory_space<vmem>>, vector<1x8x128xf32>
    %6 = vector.shape_cast %5 : vector<1x8x128xf32> to vector<8x128xf32>
    %c0_5 = arith.constant 0 : index
    %c0_6 = arith.constant 0 : index
    %7 = vector.load %arg3[%c0_5, %c0_6] : memref<128x128xf32, #tpu.memory_space<vmem>>, vector<128x128xf32>
    %cst = arith.constant dense<0.000000e+00> : vector<8x128xf32>
    %8 = tpu.matmul %3, %7, %cst {dimension_numbers = #tpu.dot_dimension_numbers<[1], [0], [0], [1], [0, 0, 1, 1], [], []>} : vector<8x128xf32>, vector<128x128xf32>, vector<8x128xf32> -> vector<8x128xf32>
    %9 = arith.addf %6, %8 : vector<8x128xf32>
    %10 = math.tanh %9 : vector<8x128xf32>
    %11 = arith.index_cast %c0_i32_2 : i32 to index
    %c0_7 = arith.constant 0 : index
    %c0_8 = arith.constant 0 : index
    %12 = vector.load %arg7[%11, %c0_7, %c0_8] : memref<8x8x128xf32, #tpu.memory_space<vmem>>, vector<1x8x128xf32>
    %13 = vector.shape_cast %12 : vector<1x8x128xf32> to vector<8x128xf32>
    %14 = vector.shape_cast %10 : vector<8x128xf32> to vector<1x8x128xf32>
    tpu.vector_store %arg7[%11, %c0_7, %c0_8], %14 {strides = array<i32>} : memref<8x8x128xf32, #tpu.memory_space<vmem>>, vector<1x8x128xf32>,
    %c1_i32 = arith.constant 1 : i32
    %15 = arith.index_cast %c1_i32 : i32 to index
    %c0_9 = arith.constant 0 : index
    %c0_10 = arith.constant 0 : index
    %16 = vector.load %arg2[%15, %c0_9, %c0_10] : memref<8x8x128xf32, #tpu.memory_space<vmem>>, vector<1x8x128xf32>
    %17 = vector.shape_cast %16 : vector<1x8x128xf32> to vector<8x128xf32>
    %c0_11 = arith.constant 0 : index
    %c0_12 = arith.constant 0 : index
    %18 = vector.load %arg3[%c0_11, %c0_12] : memref<128x128xf32, #tpu.memory_space<vmem>>, vector<128x128xf32>
    %cst_13 = arith.constant dense<0.000000e+00> : vector<8x128xf32>
    %19 = tpu.matmul %10, %18, %cst_13 {dimension_numbers = #tpu.dot_dimension_numbers<[1], [0], [0], [1], [0, 0, 1, 1], [], []>} : vector<8x128xf32>, vector<128x128xf32>, vector<8x128xf32> -> vector<8x128xf32>
    %20 = arith.addf %17, %19 : vector<8x128xf32>
    %21 = math.tanh %20 : vector<8x128xf32>
    %22 = arith.index_cast %c1_i32 : i32 to index
    %c0_14 = arith.constant 0 : index
    %c0_15 = arith.constant 0 : index
    %23 = vector.load %arg7[%22, %c0_14, %c0_15] : memref<8x8x128xf32, #tpu.memory_space<vmem>>, vector<1x8x128xf32>
    %24 = vector.shape_cast %23 : vector<1x8x128xf32> to vector<8x128xf32>
    %25 = vector.shape_cast %21 : vector<8x128xf32> to vector<1x8x128xf32>
    tpu.vector_store %arg7[%22, %c0_14, %c0_15], %25 {strides = array<i32>} : memref<8x8x128xf32, #tpu.memory_space<vmem>>, vector<1x8x128xf32>,
    %c2_i32 = arith.constant 2 : i32
    %26 = arith.index_cast %c2_i32 : i32 to index
    %c0_16 = arith.constant 0 : index
    %c0_17 = arith.constant 0 : index
    %27 = vector.load %arg2[%26, %c0_16, %c0_17] : memref<8x8x128xf32, #tpu.memory_space<vmem>>, vector<1x8x128xf32>
    %28 = vector.shape_cast %27 : vector<1x8x128xf32> to vector<8x128xf32>
    %c0_18 = arith.constant 0 : index
    %c0_19 = arith.constant 0 : index
    %29 = vector.load %arg3[%c0_18, %c0_19] : memref<128x128xf32, #tpu.memory_space<vmem>>, vector<128x128xf32>
    %cst_20 = arith.constant dense<0.000000e+00> : vector<8x128xf32>
    %30 = tpu.matmul %21, %29, %cst_20 {dimension_numbers = #tpu.dot_dimension_numbers<[1], [0], [0], [1], [0, 0, 1, 1], [], []>} : vector<8x128xf32>, vector<128x128xf32>, vector<8x128xf32> -> vector<8x128xf32>
    %31 = arith.addf %28, %30 : vector<8x128xf32>
    %32 = math.tanh %31 : vector<8x128xf32>
    %33 = arith.index_cast %c2_i32 : i32 to index
    %c0_21 = arith.constant 0 : index
    %c0_22 = arith.constant 0 : index
    %34 = vector.load %arg7[%33, %c0_21, %c0_22] : memref<8x8x128xf32, #tpu.memory_space<vmem>>, vector<1x8x128xf32>
    %35 = vector.shape_cast %34 : vector<1x8x128xf32> to vector<8x128xf32>
    %36 = vector.shape_cast %32 : vector<8x128xf32> to vector<1x8x128xf32>
    tpu.vector_store %arg7[%33, %c0_21, %c0_22], %36 {strides = array<i32>} : memref<8x8x128xf32, #tpu.memory_space<vmem>>, vector<1x8x128xf32>,
    %c3_i32 = arith.constant 3 : i32
    %37 = arith.index_cast %c3_i32 : i32 to index
    %c0_23 = arith.constant 0 : index
    %c0_24 = arith.constant 0 : index
    %38 = vector.load %arg2[%37, %c0_23, %c0_24] : memref<8x8x128xf32, #tpu.memory_space<vmem>>, vector<1x8x128xf32>
    %39 = vector.shape_cast %38 : vector<1x8x128xf32> to vector<8x128xf32>
    %c0_25 = arith.constant 0 : index
    %c0_26 = arith.constant 0 : index
    %40 = vector.load %arg3[%c0_25, %c0_26] : memref<128x128xf32, #tpu.memory_space<vmem>>, vector<128x128xf32>
    %cst_27 = arith.constant dense<0.000000e+00> : vector<8x128xf32>
    %41 = tpu.matmul %32, %40, %cst_27 {dimension_numbers = #tpu.dot_dimension_numbers<[1], [0], [0], [1], [0, 0, 1, 1], [], []>} : vector<8x128xf32>, vector<128x128xf32>, vector<8x128xf32> -> vector<8x128xf32>
    %42 = arith.addf %39, %41 : vector<8x128xf32>
    %43 = math.tanh %42 : vector<8x128xf32>
    %44 = arith.index_cast %c3_i32 : i32 to index
    %c0_28 = arith.constant 0 : index
    %c0_29 = arith.constant 0 : index
    %45 = vector.load %arg7[%44, %c0_28, %c0_29] : memref<8x8x128xf32, #tpu.memory_space<vmem>>, vector<1x8x128xf32>
    %46 = vector.shape_cast %45 : vector<1x8x128xf32> to vector<8x128xf32>
    %47 = vector.shape_cast %43 : vector<8x128xf32> to vector<1x8x128xf32>
    tpu.vector_store %arg7[%44, %c0_28, %c0_29], %47 {strides = array<i32>} : memref<8x8x128xf32, #tpu.memory_space<vmem>>, vector<1x8x128xf32>,
    %c4_i32 = arith.constant 4 : i32
    %48 = arith.index_cast %c4_i32 : i32 to index
    %c0_30 = arith.constant 0 : index
    %c0_31 = arith.constant 0 : index
    %49 = vector.load %arg2[%48, %c0_30, %c0_31] : memref<8x8x128xf32, #tpu.memory_space<vmem>>, vector<1x8x128xf32>
    %50 = vector.shape_cast %49 : vector<1x8x128xf32> to vector<8x128xf32>
    %c0_32 = arith.constant 0 : index
    %c0_33 = arith.constant 0 : index
    %51 = vector.load %arg3[%c0_32, %c0_33] : memref<128x128xf32, #tpu.memory_space<vmem>>, vector<128x128xf32>
    %cst_34 = arith.constant dense<0.000000e+00> : vector<8x128xf32>
    %52 = tpu.matmul %43, %51, %cst_34 {dimension_numbers = #tpu.dot_dimension_numbers<[1], [0], [0], [1], [0, 0, 1, 1], [], []>} : vector<8x128xf32>, vector<128x128xf32>, vector<8x128xf32> -> vector<8x128xf32>
    %53 = arith.addf %50, %52 : vector<8x128xf32>
    %54 = math.tanh %53 : vector<8x128xf32>
    %55 = arith.index_cast %c4_i32 : i32 to index
    %c0_35 = arith.constant 0 : index
    %c0_36 = arith.constant 0 : index
    %56 = vector.load %arg7[%55, %c0_35, %c0_36] : memref<8x8x128xf32, #tpu.memory_space<vmem>>, vector<1x8x128xf32>
    %57 = vector.shape_cast %56 : vector<1x8x128xf32> to vector<8x128xf32>
    %58 = vector.shape_cast %54 : vector<8x128xf32> to vector<1x8x128xf32>
    tpu.vector_store %arg7[%55, %c0_35, %c0_36], %58 {strides = array<i32>} : memref<8x8x128xf32, #tpu.memory_space<vmem>>, vector<1x8x128xf32>,
    %c5_i32 = arith.constant 5 : i32
    %59 = arith.index_cast %c5_i32 : i32 to index
    %c0_37 = arith.constant 0 : index
    %c0_38 = arith.constant 0 : index
    %60 = vector.load %arg2[%59, %c0_37, %c0_38] : memref<8x8x128xf32, #tpu.memory_space<vmem>>, vector<1x8x128xf32>
    %61 = vector.shape_cast %60 : vector<1x8x128xf32> to vector<8x128xf32>
    %c0_39 = arith.constant 0 : index
    %c0_40 = arith.constant 0 : index
    %62 = vector.load %arg3[%c0_39, %c0_40] : memref<128x128xf32, #tpu.memory_space<vmem>>, vector<128x128xf32>
    %cst_41 = arith.constant dense<0.000000e+00> : vector<8x128xf32>
    %63 = tpu.matmul %54, %62, %cst_41 {dimension_numbers = #tpu.dot_dimension_numbers<[1], [0], [0], [1], [0, 0, 1, 1], [], []>} : vector<8x128xf32>, vector<128x128xf32>, vector<8x128xf32> -> vector<8x128xf32>
    %64 = arith.addf %61, %63 : vector<8x128xf32>
    %65 = math.tanh %64 : vector<8x128xf32>
    %66 = arith.index_cast %c5_i32 : i32 to index
    %c0_42 = arith.constant 0 : index
    %c0_43 = arith.constant 0 : index
    %67 = vector.load %arg7[%66, %c0_42, %c0_43] : memref<8x8x128xf32, #tpu.memory_space<vmem>>, vector<1x8x128xf32>
    %68 = vector.shape_cast %67 : vector<1x8x128xf32> to vector<8x128xf32>
    %69 = vector.shape_cast %65 : vector<8x128xf32> to vector<1x8x128xf32>
    tpu.vector_store %arg7[%66, %c0_42, %c0_43], %69 {strides = array<i32>} : memref<8x8x128xf32, #tpu.memory_space<vmem>>, vector<1x8x128xf32>,
    %c6_i32 = arith.constant 6 : i32
    %70 = arith.index_cast %c6_i32 : i32 to index
    %c0_44 = arith.constant 0 : index
    %c0_45 = arith.constant 0 : index
    %71 = vector.load %arg2[%70, %c0_44, %c0_45] : memref<8x8x128xf32, #tpu.memory_space<vmem>>, vector<1x8x128xf32>
    %72 = vector.shape_cast %71 : vector<1x8x128xf32> to vector<8x128xf32>
    %c0_46 = arith.constant 0 : index
    %c0_47 = arith.constant 0 : index
    %73 = vector.load %arg3[%c0_46, %c0_47] : memref<128x128xf32, #tpu.memory_space<vmem>>, vector<128x128xf32>
    %cst_48 = arith.constant dense<0.000000e+00> : vector<8x128xf32>
    %74 = tpu.matmul %65, %73, %cst_48 {dimension_numbers = #tpu.dot_dimension_numbers<[1], [0], [0], [1], [0, 0, 1, 1], [], []>} : vector<8x128xf32>, vector<128x128xf32>, vector<8x128xf32> -> vector<8x128xf32>
    %75 = arith.addf %72, %74 : vector<8x128xf32>
    %76 = math.tanh %75 : vector<8x128xf32>
    %77 = arith.index_cast %c6_i32 : i32 to index
    %c0_49 = arith.constant 0 : index
    %c0_50 = arith.constant 0 : index
    %78 = vector.load %arg7[%77, %c0_49, %c0_50] : memref<8x8x128xf32, #tpu.memory_space<vmem>>, vector<1x8x128xf32>
    %79 = vector.shape_cast %78 : vector<1x8x128xf32> to vector<8x128xf32>
    %80 = vector.shape_cast %76 : vector<8x128xf32> to vector<1x8x128xf32>
    tpu.vector_store %arg7[%77, %c0_49, %c0_50], %80 {strides = array<i32>} : memref<8x8x128xf32, #tpu.memory_space<vmem>>, vector<1x8x128xf32>,
    %c7_i32 = arith.constant 7 : i32
    %81 = arith.index_cast %c7_i32 : i32 to index
    %c0_51 = arith.constant 0 : index
    %c0_52 = arith.constant 0 : index
    %82 = vector.load %arg2[%81, %c0_51, %c0_52] : memref<8x8x128xf32, #tpu.memory_space<vmem>>, vector<1x8x128xf32>
    %83 = vector.shape_cast %82 : vector<1x8x128xf32> to vector<8x128xf32>
    %c0_53 = arith.constant 0 : index
    %c0_54 = arith.constant 0 : index
    %84 = vector.load %arg3[%c0_53, %c0_54] : memref<128x128xf32, #tpu.memory_space<vmem>>, vector<128x128xf32>
    %cst_55 = arith.constant dense<0.000000e+00> : vector<8x128xf32>
    %85 = tpu.matmul %76, %84, %cst_55 {dimension_numbers = #tpu.dot_dimension_numbers<[1], [0], [0], [1], [0, 0, 1, 1], [], []>} : vector<8x128xf32>, vector<128x128xf32>, vector<8x128xf32> -> vector<8x128xf32>
    %86 = arith.addf %83, %85 : vector<8x128xf32>
    %87 = math.tanh %86 : vector<8x128xf32>
    %88 = arith.index_cast %c7_i32 : i32 to index
    %c0_56 = arith.constant 0 : index
    %c0_57 = arith.constant 0 : index
    %89 = vector.load %arg7[%88, %c0_56, %c0_57] : memref<8x8x128xf32, #tpu.memory_space<vmem>>, vector<1x8x128xf32>
    %90 = vector.shape_cast %89 : vector<1x8x128xf32> to vector<8x128xf32>
    %91 = vector.shape_cast %87 : vector<8x128xf32> to vector<1x8x128xf32>
    tpu.vector_store %arg7[%88, %c0_56, %c0_57], %91 {strides = array<i32>} : memref<8x8x128xf32, #tpu.memory_space<vmem>>, vector<1x8x128xf32>,
    %c8_i32 = arith.constant 8 : i32
    %c0_58 = arith.constant 0 : index
    %c0_59 = arith.constant 0 : index
    %92 = vector.load %arg6[%c0_58, %c0_59] : memref<8x128xf32, #tpu.memory_space<vmem>>, vector<8x128xf32>
    tpu.vector_store %arg6[%c0_58, %c0_59], %87 {strides = array<i32>} : memref<8x128xf32, #tpu.memory_space<vmem>>, vector<8x128xf32>,
    %c0_60 = arith.constant 0 : index
    %c0_61 = arith.constant 0 : index
    %c0_62 = arith.constant 0 : index
    %93 = vector.load %arg7[%c0_60, %c0_61, %c0_62] : memref<8x8x128xf32, #tpu.memory_space<vmem>>, vector<8x8x128xf32>
    %c0_63 = arith.constant 0 : index
    %c0_64 = arith.constant 0 : index
    %94 = vector.load %arg4[%c0_63, %c0_64] : memref<1x128xf32, #tpu.memory_space<vmem>>, vector<1x128xf32>
    %95 = vector.shape_cast %94 : vector<1x128xf32> to vector<1x1x128xf32>
    %96 = vector.broadcast %95 : vector<1x1x128xf32> to vector<8x8x128xf32>
    %97 = arith.mulf %93, %96 : vector<8x8x128xf32>
    %cst_65 = arith.constant dense<0.000000e+00> : vector<8x8xf32>
    %98 = vector.multi_reduction <add>, %97, %cst_65 [2] : vector<8x8x128xf32> to vector<8x8xf32>
    %c0_66 = arith.constant 0 : index
    %c0_67 = arith.constant 0 : index
    %99 = vector.load %arg5[%c0_66, %c0_67] : memref<8x8xf32, #tpu.memory_space<vmem>>, vector<8x8xf32>
    tpu.vector_store %arg5[%c0_66, %c0_67], %98 {strides = array<i32>} : memref<8x8xf32, #tpu.memory_space<vmem>>, vector<8x8xf32>,
    return
  }
  func.func @transform_0(%arg0: i32, %arg1: i32) -> (i32, i32, i32) {
    %c0_i32 = arith.constant 0 : i32
    %c0_i32_0 = arith.constant 0 : i32
    return %arg1, %arg0, %c0_i32 : i32, i32, i32
  }
  func.func @transform_1(%arg0: i32, %arg1: i32) -> (i32, i32) {
    %c0_i32 = arith.constant 0 : i32
    %c0_i32_0 = arith.constant 0 : i32
    %c0_i32_1 = arith.constant 0 : i32
    return %c0_i32, %c0_i32_0 : i32, i32
  }
  func.func @transform_2(%arg0: i32, %arg1: i32) -> (i32, i32) {
    %c0_i32 = arith.constant 0 : i32
    %c0_i32_0 = arith.constant 0 : i32
    %c0_i32_1 = arith.constant 0 : i32
    return %c0_i32, %c0_i32_0 : i32, i32
  }
  func.func @transform_3(%arg0: i32, %arg1: i32) -> (i32, i32) {
    %c0_i32 = arith.constant 0 : i32
    return %arg1, %arg0 : i32, i32
  }
}

module attributes {stable_mosaic.version = 11 : i64} {
  func.func @_rnn_mid_kernel(%arg0: i32, %arg1: i32, %arg2: memref<8x8x128xf32, #tpu.memory_space<vmem>>, %arg3: memref<128x128xf32, #tpu.memory_space<vmem>>, %arg4: memref<128x128xf32, #tpu.memory_space<vmem>>, %arg5: memref<1x128xf32, #tpu.memory_space<vmem>>, %arg6: memref<8x8x128xf32, #tpu.memory_space<vmem>>, %arg7: memref<8x128xf32, #tpu.memory_space<vmem>>, %arg8: memref<8x8x128xf32, #tpu.memory_space<vmem>>) attributes {dimension_semantics = [#tpu.dimension_semantics<parallel>, #tpu.dimension_semantics<arbitrary>], iteration_bounds = array<i64: 1, 1>, scalar_prefetch = 0 : i64, scratch_operands = 2 : i64, tpu.core_type = #tpu.core_type<tc>, window_params = [{transform_indices = @transform_0, window_bounds = array<i64: 8, 8, 128>}, {pipeline_mode = #tpu.pipeline_mode<synchronous>, transform_indices = @transform_1, window_bounds = array<i64: 128, 128>}, {pipeline_mode = #tpu.pipeline_mode<synchronous>, transform_indices = @transform_2, window_bounds = array<i64: 128, 128>}, {pipeline_mode = #tpu.pipeline_mode<synchronous>, transform_indices = @transform_3, window_bounds = array<i64: 1, 128>}, {transform_indices = @transform_4, window_bounds = array<i64: 8, 8, 128>}]} {
    %c0_i32 = arith.constant 0 : i32
    %0 = arith.cmpi eq, %arg1, %c0_i32 : i32
    %1 = arith.extui %0 : i1 to i32
    %c0_i32_0 = arith.constant 0 : i32
    %2 = arith.cmpi ne, %1, %c0_i32_0 : i32
    scf.if %2 {
      %cst_71 = arith.constant 0.000000e+00 : f32
      %102 = vector.broadcast %cst_71 : f32 to vector<8x128xf32>
      %c0_72 = arith.constant 0 : index
      %c0_73 = arith.constant 0 : index
      %103 = vector.load %arg7[%c0_72, %c0_73] : memref<8x128xf32, #tpu.memory_space<vmem>>, vector<8x128xf32>
      tpu.vector_store %arg7[%c0_72, %c0_73], %102 {strides = array<i32>} : memref<8x128xf32, #tpu.memory_space<vmem>>, vector<8x128xf32>,
    } else {
    }
    %c0 = arith.constant 0 : index
    %c0_1 = arith.constant 0 : index
    %3 = vector.load %arg7[%c0, %c0_1] : memref<8x128xf32, #tpu.memory_space<vmem>>, vector<8x128xf32>
    %c0_i32_2 = arith.constant 0 : i32
    %4 = arith.index_cast %c0_i32_2 : i32 to index
    %c0_3 = arith.constant 0 : index
    %c0_4 = arith.constant 0 : index
    %5 = vector.load %arg2[%4, %c0_3, %c0_4] : memref<8x8x128xf32, #tpu.memory_space<vmem>>, vector<1x8x128xf32>
    %6 = vector.shape_cast %5 : vector<1x8x128xf32> to vector<8x128xf32>
    %c0_5 = arith.constant 0 : index
    %c0_6 = arith.constant 0 : index
    %7 = vector.load %arg3[%c0_5, %c0_6] : memref<128x128xf32, #tpu.memory_space<vmem>>, vector<128x128xf32>
    %cst = arith.constant dense<0.000000e+00> : vector<8x128xf32>
    %8 = tpu.matmul %3, %7, %cst {dimension_numbers = #tpu.dot_dimension_numbers<[1], [0], [0], [1], [0, 0, 1, 1], [], []>} : vector<8x128xf32>, vector<128x128xf32>, vector<8x128xf32> -> vector<8x128xf32>
    %9 = arith.addf %6, %8 : vector<8x128xf32>
    %10 = math.tanh %9 : vector<8x128xf32>
    %11 = arith.index_cast %c0_i32_2 : i32 to index
    %c0_7 = arith.constant 0 : index
    %c0_8 = arith.constant 0 : index
    %12 = vector.load %arg8[%11, %c0_7, %c0_8] : memref<8x8x128xf32, #tpu.memory_space<vmem>>, vector<1x8x128xf32>
    %13 = vector.shape_cast %12 : vector<1x8x128xf32> to vector<8x128xf32>
    %14 = vector.shape_cast %10 : vector<8x128xf32> to vector<1x8x128xf32>
    tpu.vector_store %arg8[%11, %c0_7, %c0_8], %14 {strides = array<i32>} : memref<8x8x128xf32, #tpu.memory_space<vmem>>, vector<1x8x128xf32>,
    %c1_i32 = arith.constant 1 : i32
    %15 = arith.index_cast %c1_i32 : i32 to index
    %c0_9 = arith.constant 0 : index
    %c0_10 = arith.constant 0 : index
    %16 = vector.load %arg2[%15, %c0_9, %c0_10] : memref<8x8x128xf32, #tpu.memory_space<vmem>>, vector<1x8x128xf32>
    %17 = vector.shape_cast %16 : vector<1x8x128xf32> to vector<8x128xf32>
    %c0_11 = arith.constant 0 : index
    %c0_12 = arith.constant 0 : index
    %18 = vector.load %arg3[%c0_11, %c0_12] : memref<128x128xf32, #tpu.memory_space<vmem>>, vector<128x128xf32>
    %cst_13 = arith.constant dense<0.000000e+00> : vector<8x128xf32>
    %19 = tpu.matmul %10, %18, %cst_13 {dimension_numbers = #tpu.dot_dimension_numbers<[1], [0], [0], [1], [0, 0, 1, 1], [], []>} : vector<8x128xf32>, vector<128x128xf32>, vector<8x128xf32> -> vector<8x128xf32>
    %20 = arith.addf %17, %19 : vector<8x128xf32>
    %21 = math.tanh %20 : vector<8x128xf32>
    %22 = arith.index_cast %c1_i32 : i32 to index
    %c0_14 = arith.constant 0 : index
    %c0_15 = arith.constant 0 : index
    %23 = vector.load %arg8[%22, %c0_14, %c0_15] : memref<8x8x128xf32, #tpu.memory_space<vmem>>, vector<1x8x128xf32>
    %24 = vector.shape_cast %23 : vector<1x8x128xf32> to vector<8x128xf32>
    %25 = vector.shape_cast %21 : vector<8x128xf32> to vector<1x8x128xf32>
    tpu.vector_store %arg8[%22, %c0_14, %c0_15], %25 {strides = array<i32>} : memref<8x8x128xf32, #tpu.memory_space<vmem>>, vector<1x8x128xf32>,
    %c2_i32 = arith.constant 2 : i32
    %26 = arith.index_cast %c2_i32 : i32 to index
    %c0_16 = arith.constant 0 : index
    %c0_17 = arith.constant 0 : index
    %27 = vector.load %arg2[%26, %c0_16, %c0_17] : memref<8x8x128xf32, #tpu.memory_space<vmem>>, vector<1x8x128xf32>
    %28 = vector.shape_cast %27 : vector<1x8x128xf32> to vector<8x128xf32>
    %c0_18 = arith.constant 0 : index
    %c0_19 = arith.constant 0 : index
    %29 = vector.load %arg3[%c0_18, %c0_19] : memref<128x128xf32, #tpu.memory_space<vmem>>, vector<128x128xf32>
    %cst_20 = arith.constant dense<0.000000e+00> : vector<8x128xf32>
    %30 = tpu.matmul %21, %29, %cst_20 {dimension_numbers = #tpu.dot_dimension_numbers<[1], [0], [0], [1], [0, 0, 1, 1], [], []>} : vector<8x128xf32>, vector<128x128xf32>, vector<8x128xf32> -> vector<8x128xf32>
    %31 = arith.addf %28, %30 : vector<8x128xf32>
    %32 = math.tanh %31 : vector<8x128xf32>
    %33 = arith.index_cast %c2_i32 : i32 to index
    %c0_21 = arith.constant 0 : index
    %c0_22 = arith.constant 0 : index
    %34 = vector.load %arg8[%33, %c0_21, %c0_22] : memref<8x8x128xf32, #tpu.memory_space<vmem>>, vector<1x8x128xf32>
    %35 = vector.shape_cast %34 : vector<1x8x128xf32> to vector<8x128xf32>
    %36 = vector.shape_cast %32 : vector<8x128xf32> to vector<1x8x128xf32>
    tpu.vector_store %arg8[%33, %c0_21, %c0_22], %36 {strides = array<i32>} : memref<8x8x128xf32, #tpu.memory_space<vmem>>, vector<1x8x128xf32>,
    %c3_i32 = arith.constant 3 : i32
    %37 = arith.index_cast %c3_i32 : i32 to index
    %c0_23 = arith.constant 0 : index
    %c0_24 = arith.constant 0 : index
    %38 = vector.load %arg2[%37, %c0_23, %c0_24] : memref<8x8x128xf32, #tpu.memory_space<vmem>>, vector<1x8x128xf32>
    %39 = vector.shape_cast %38 : vector<1x8x128xf32> to vector<8x128xf32>
    %c0_25 = arith.constant 0 : index
    %c0_26 = arith.constant 0 : index
    %40 = vector.load %arg3[%c0_25, %c0_26] : memref<128x128xf32, #tpu.memory_space<vmem>>, vector<128x128xf32>
    %cst_27 = arith.constant dense<0.000000e+00> : vector<8x128xf32>
    %41 = tpu.matmul %32, %40, %cst_27 {dimension_numbers = #tpu.dot_dimension_numbers<[1], [0], [0], [1], [0, 0, 1, 1], [], []>} : vector<8x128xf32>, vector<128x128xf32>, vector<8x128xf32> -> vector<8x128xf32>
    %42 = arith.addf %39, %41 : vector<8x128xf32>
    %43 = math.tanh %42 : vector<8x128xf32>
    %44 = arith.index_cast %c3_i32 : i32 to index
    %c0_28 = arith.constant 0 : index
    %c0_29 = arith.constant 0 : index
    %45 = vector.load %arg8[%44, %c0_28, %c0_29] : memref<8x8x128xf32, #tpu.memory_space<vmem>>, vector<1x8x128xf32>
    %46 = vector.shape_cast %45 : vector<1x8x128xf32> to vector<8x128xf32>
    %47 = vector.shape_cast %43 : vector<8x128xf32> to vector<1x8x128xf32>
    tpu.vector_store %arg8[%44, %c0_28, %c0_29], %47 {strides = array<i32>} : memref<8x8x128xf32, #tpu.memory_space<vmem>>, vector<1x8x128xf32>,
    %c4_i32 = arith.constant 4 : i32
    %48 = arith.index_cast %c4_i32 : i32 to index
    %c0_30 = arith.constant 0 : index
    %c0_31 = arith.constant 0 : index
    %49 = vector.load %arg2[%48, %c0_30, %c0_31] : memref<8x8x128xf32, #tpu.memory_space<vmem>>, vector<1x8x128xf32>
    %50 = vector.shape_cast %49 : vector<1x8x128xf32> to vector<8x128xf32>
    %c0_32 = arith.constant 0 : index
    %c0_33 = arith.constant 0 : index
    %51 = vector.load %arg3[%c0_32, %c0_33] : memref<128x128xf32, #tpu.memory_space<vmem>>, vector<128x128xf32>
    %cst_34 = arith.constant dense<0.000000e+00> : vector<8x128xf32>
    %52 = tpu.matmul %43, %51, %cst_34 {dimension_numbers = #tpu.dot_dimension_numbers<[1], [0], [0], [1], [0, 0, 1, 1], [], []>} : vector<8x128xf32>, vector<128x128xf32>, vector<8x128xf32> -> vector<8x128xf32>
    %53 = arith.addf %50, %52 : vector<8x128xf32>
    %54 = math.tanh %53 : vector<8x128xf32>
    %55 = arith.index_cast %c4_i32 : i32 to index
    %c0_35 = arith.constant 0 : index
    %c0_36 = arith.constant 0 : index
    %56 = vector.load %arg8[%55, %c0_35, %c0_36] : memref<8x8x128xf32, #tpu.memory_space<vmem>>, vector<1x8x128xf32>
    %57 = vector.shape_cast %56 : vector<1x8x128xf32> to vector<8x128xf32>
    %58 = vector.shape_cast %54 : vector<8x128xf32> to vector<1x8x128xf32>
    tpu.vector_store %arg8[%55, %c0_35, %c0_36], %58 {strides = array<i32>} : memref<8x8x128xf32, #tpu.memory_space<vmem>>, vector<1x8x128xf32>,
    %c5_i32 = arith.constant 5 : i32
    %59 = arith.index_cast %c5_i32 : i32 to index
    %c0_37 = arith.constant 0 : index
    %c0_38 = arith.constant 0 : index
    %60 = vector.load %arg2[%59, %c0_37, %c0_38] : memref<8x8x128xf32, #tpu.memory_space<vmem>>, vector<1x8x128xf32>
    %61 = vector.shape_cast %60 : vector<1x8x128xf32> to vector<8x128xf32>
    %c0_39 = arith.constant 0 : index
    %c0_40 = arith.constant 0 : index
    %62 = vector.load %arg3[%c0_39, %c0_40] : memref<128x128xf32, #tpu.memory_space<vmem>>, vector<128x128xf32>
    %cst_41 = arith.constant dense<0.000000e+00> : vector<8x128xf32>
    %63 = tpu.matmul %54, %62, %cst_41 {dimension_numbers = #tpu.dot_dimension_numbers<[1], [0], [0], [1], [0, 0, 1, 1], [], []>} : vector<8x128xf32>, vector<128x128xf32>, vector<8x128xf32> -> vector<8x128xf32>
    %64 = arith.addf %61, %63 : vector<8x128xf32>
    %65 = math.tanh %64 : vector<8x128xf32>
    %66 = arith.index_cast %c5_i32 : i32 to index
    %c0_42 = arith.constant 0 : index
    %c0_43 = arith.constant 0 : index
    %67 = vector.load %arg8[%66, %c0_42, %c0_43] : memref<8x8x128xf32, #tpu.memory_space<vmem>>, vector<1x8x128xf32>
    %68 = vector.shape_cast %67 : vector<1x8x128xf32> to vector<8x128xf32>
    %69 = vector.shape_cast %65 : vector<8x128xf32> to vector<1x8x128xf32>
    tpu.vector_store %arg8[%66, %c0_42, %c0_43], %69 {strides = array<i32>} : memref<8x8x128xf32, #tpu.memory_space<vmem>>, vector<1x8x128xf32>,
    %c6_i32 = arith.constant 6 : i32
    %70 = arith.index_cast %c6_i32 : i32 to index
    %c0_44 = arith.constant 0 : index
    %c0_45 = arith.constant 0 : index
    %71 = vector.load %arg2[%70, %c0_44, %c0_45] : memref<8x8x128xf32, #tpu.memory_space<vmem>>, vector<1x8x128xf32>
    %72 = vector.shape_cast %71 : vector<1x8x128xf32> to vector<8x128xf32>
    %c0_46 = arith.constant 0 : index
    %c0_47 = arith.constant 0 : index
    %73 = vector.load %arg3[%c0_46, %c0_47] : memref<128x128xf32, #tpu.memory_space<vmem>>, vector<128x128xf32>
    %cst_48 = arith.constant dense<0.000000e+00> : vector<8x128xf32>
    %74 = tpu.matmul %65, %73, %cst_48 {dimension_numbers = #tpu.dot_dimension_numbers<[1], [0], [0], [1], [0, 0, 1, 1], [], []>} : vector<8x128xf32>, vector<128x128xf32>, vector<8x128xf32> -> vector<8x128xf32>
    %75 = arith.addf %72, %74 : vector<8x128xf32>
    %76 = math.tanh %75 : vector<8x128xf32>
    %77 = arith.index_cast %c6_i32 : i32 to index
    %c0_49 = arith.constant 0 : index
    %c0_50 = arith.constant 0 : index
    %78 = vector.load %arg8[%77, %c0_49, %c0_50] : memref<8x8x128xf32, #tpu.memory_space<vmem>>, vector<1x8x128xf32>
    %79 = vector.shape_cast %78 : vector<1x8x128xf32> to vector<8x128xf32>
    %80 = vector.shape_cast %76 : vector<8x128xf32> to vector<1x8x128xf32>
    tpu.vector_store %arg8[%77, %c0_49, %c0_50], %80 {strides = array<i32>} : memref<8x8x128xf32, #tpu.memory_space<vmem>>, vector<1x8x128xf32>,
    %c7_i32 = arith.constant 7 : i32
    %81 = arith.index_cast %c7_i32 : i32 to index
    %c0_51 = arith.constant 0 : index
    %c0_52 = arith.constant 0 : index
    %82 = vector.load %arg2[%81, %c0_51, %c0_52] : memref<8x8x128xf32, #tpu.memory_space<vmem>>, vector<1x8x128xf32>
    %83 = vector.shape_cast %82 : vector<1x8x128xf32> to vector<8x128xf32>
    %c0_53 = arith.constant 0 : index
    %c0_54 = arith.constant 0 : index
    %84 = vector.load %arg3[%c0_53, %c0_54] : memref<128x128xf32, #tpu.memory_space<vmem>>, vector<128x128xf32>
    %cst_55 = arith.constant dense<0.000000e+00> : vector<8x128xf32>
    %85 = tpu.matmul %76, %84, %cst_55 {dimension_numbers = #tpu.dot_dimension_numbers<[1], [0], [0], [1], [0, 0, 1, 1], [], []>} : vector<8x128xf32>, vector<128x128xf32>, vector<8x128xf32> -> vector<8x128xf32>
    %86 = arith.addf %83, %85 : vector<8x128xf32>
    %87 = math.tanh %86 : vector<8x128xf32>
    %88 = arith.index_cast %c7_i32 : i32 to index
    %c0_56 = arith.constant 0 : index
    %c0_57 = arith.constant 0 : index
    %89 = vector.load %arg8[%88, %c0_56, %c0_57] : memref<8x8x128xf32, #tpu.memory_space<vmem>>, vector<1x8x128xf32>
    %90 = vector.shape_cast %89 : vector<1x8x128xf32> to vector<8x128xf32>
    %91 = vector.shape_cast %87 : vector<8x128xf32> to vector<1x8x128xf32>
    tpu.vector_store %arg8[%88, %c0_56, %c0_57], %91 {strides = array<i32>} : memref<8x8x128xf32, #tpu.memory_space<vmem>>, vector<1x8x128xf32>,
    %c8_i32 = arith.constant 8 : i32
    %c0_58 = arith.constant 0 : index
    %c0_59 = arith.constant 0 : index
    %92 = vector.load %arg7[%c0_58, %c0_59] : memref<8x128xf32, #tpu.memory_space<vmem>>, vector<8x128xf32>
    tpu.vector_store %arg7[%c0_58, %c0_59], %87 {strides = array<i32>} : memref<8x128xf32, #tpu.memory_space<vmem>>, vector<8x128xf32>,
    %c0_60 = arith.constant 0 : index
    %c0_61 = arith.constant 0 : index
    %c0_62 = arith.constant 0 : index
    %93 = vector.load %arg8[%c0_60, %c0_61, %c0_62] : memref<8x8x128xf32, #tpu.memory_space<vmem>>, vector<8x8x128xf32>
    %94 = vector.shape_cast %93 : vector<8x8x128xf32> to vector<64x128xf32>
    %c0_63 = arith.constant 0 : index
    %c0_64 = arith.constant 0 : index
    %95 = vector.load %arg4[%c0_63, %c0_64] : memref<128x128xf32, #tpu.memory_space<vmem>>, vector<128x128xf32>
    %cst_65 = arith.constant dense<0.000000e+00> : vector<64x128xf32>
    %96 = tpu.matmul %94, %95, %cst_65 {dimension_numbers = #tpu.dot_dimension_numbers<[1], [0], [0], [1], [0, 0, 1, 1], [], []>} : vector<64x128xf32>, vector<128x128xf32>, vector<64x128xf32> -> vector<64x128xf32>
    %c0_66 = arith.constant 0 : index
    %c0_67 = arith.constant 0 : index
    %97 = vector.load %arg5[%c0_66, %c0_67] : memref<1x128xf32, #tpu.memory_space<vmem>>, vector<1x128xf32>
    %98 = vector.broadcast %97 : vector<1x128xf32> to vector<64x128xf32>
    %99 = arith.addf %96, %98 : vector<64x128xf32>
    %100 = vector.shape_cast %99 : vector<64x128xf32> to vector<8x8x128xf32>
    %c0_68 = arith.constant 0 : index
    %c0_69 = arith.constant 0 : index
    %c0_70 = arith.constant 0 : index
    %101 = vector.load %arg6[%c0_68, %c0_69, %c0_70] : memref<8x8x128xf32, #tpu.memory_space<vmem>>, vector<8x8x128xf32>
    tpu.vector_store %arg6[%c0_68, %c0_69, %c0_70], %100 {strides = array<i32>} : memref<8x8x128xf32, #tpu.memory_space<vmem>>, vector<8x8x128xf32>,
    return
  }
  func.func @transform_0(%arg0: i32, %arg1: i32) -> (i32, i32, i32) {
    %c0_i32 = arith.constant 0 : i32
    %c0_i32_0 = arith.constant 0 : i32
    return %arg1, %arg0, %c0_i32 : i32, i32, i32
  }
  func.func @transform_1(%arg0: i32, %arg1: i32) -> (i32, i32) {
    %c0_i32 = arith.constant 0 : i32
    %c0_i32_0 = arith.constant 0 : i32
    %c0_i32_1 = arith.constant 0 : i32
    return %c0_i32, %c0_i32_0 : i32, i32
  }
  func.func @transform_2(%arg0: i32, %arg1: i32) -> (i32, i32) {
    %c0_i32 = arith.constant 0 : i32
    %c0_i32_0 = arith.constant 0 : i32
    %c0_i32_1 = arith.constant 0 : i32
    return %c0_i32, %c0_i32_0 : i32, i32
  }
  func.func @transform_3(%arg0: i32, %arg1: i32) -> (i32, i32) {
    %c0_i32 = arith.constant 0 : i32
    %c0_i32_0 = arith.constant 0 : i32
    %c0_i32_1 = arith.constant 0 : i32
    return %c0_i32, %c0_i32_0 : i32, i32
  }
  func.func @transform_4(%arg0: i32, %arg1: i32) -> (i32, i32, i32) {
    %c0_i32 = arith.constant 0 : i32
    %c0_i32_0 = arith.constant 0 : i32
    return %arg1, %arg0, %c0_i32 : i32, i32, i32
  }
}

</mosaic_0001>

<llo_original>
// kernel: rnn_forward.2
$region0: #{rnn_forward.2}
  #allocation0 [shape = 'u32[]', space=smem, size = 0x4, offset = 0x4, fixed_abs, tag = 'smem constant byte address 0x4 - core index']
  #allocation1 [shape = 'u32[144,128]{1,0:T(1,128)}', space=vmem, size = 0x12000, scoped, tag = 'internal scratch']
  #allocation2 [shape = 'f32[8,128]{1,0:T(8,128)}', space=vmem, size = 0x1000, scoped, tag = 'scratch operand']
  #allocation3 [shape = 'f32[8,8,128]{2,1,0:T(8,128)}', space=vmem, size = 0x8000, scoped, tag = 'scratch operand']
  %s0 = inlined_call_operand.vmem [shape: f32[8,8,128], index: 0, kind: input, shape index: {}]
  %s1 = inlined_call_operand.vmem [shape: f32[128,128], index: 1, kind: input, shape index: {}]
  %s2 = inlined_call_operand.vmem [shape: f32[128,128], index: 2, kind: input, shape index: {}]
  %s3 = inlined_call_operand.vmem [shape: f32[1,128], index: 3, kind: input, shape index: {}]
  %s4 = inlined_call_operand.vmem [shape: f32[8,8,128], index: 4, kind: output, shape index: {}]
  %s5 = sld [smem:[#allocation0]]
  $region30: #{rnn_forward.2} parent=0
    _
  %s7 = ssub.s32 1, %s5
  %s8 = scalar_select 0, %s7, %s5
  // Predicated region
  $region2: #{rnn_forward.2} parent=0 // pred_check
    _
  $region3: #{rnn_forward.2} parent=0 // pred_check_branch
    %10 = sbr.rel (0) target = $region5
  $region4: #{rnn_forward.2} parent=0 // pred_region
    _
  $region5: #{rnn_forward.2} parent=0 // pred_fallthru
    _
  // Predicated region
  $region6: #{rnn_forward.2} parent=0 // pred_check
    _
  $region7: #{rnn_forward.2} parent=0 // pred_check_branch
    %12 = sbr.rel (0) target = $region9
  $region8: #{rnn_forward.2} parent=0 // pred_region
    _
  $region9: #{rnn_forward.2} parent=0 // pred_fallthru
    _
  // Predicated region
  $region10: #{rnn_forward.2} parent=0 // pred_check
    _
  $region11: #{rnn_forward.2} parent=0 // pred_check_branch
    %14 = sbr.rel (0) target = $region13
  $region12: #{rnn_forward.2} parent=0 // pred_region
    _
  $region13: #{rnn_forward.2} parent=0 // pred_fallthru
    _
  // Predicated region
  $region14: #{rnn_forward.2} parent=0 // pred_check
    _
  $region15: #{rnn_forward.2} parent=0 // pred_check_branch
    %16 = sbr.rel (0) target = $region17
  $region16: #{rnn_forward.2} parent=0 // pred_region
    _
  $region17: #{rnn_forward.2} parent=0 // pred_fallthru
    _
  %p17 = scmp.eq.s32.totalorder 0, 0
  // Predicated region
  $region18: #{rnn_forward.2} parent=0 // pred_check
    %p18 = pneg %p17
  $region19: #{rnn_forward.2} parent=0 // pred_check_branch
    %20 = sbr.rel (%p18) target = $region21
  $region20: #{rnn_forward.2} parent=0 // pred_region
    %21 = vst [vmem:[#allocation2] sm:$0xff] 0.0
  $region21: #{rnn_forward.2} parent=0 // pred_fallthru
    _
  %v22 = vld [vmem:[#allocation2] sm:$0xff]
  %v23 = vld [vmem:[%s0] sm:$0xff]
  %v24 = vld [vmem:[%s1] sm:$0xff]
  %v25 = vld [vmem:[%s1 + $0x8] sm:$0xff]
  %v26 = vld [vmem:[%s1 + $0x10] sm:$0xff]
  %v27 = vld [vmem:[%s1 + $0x18] sm:$0xff]
  %v28 = vld [vmem:[%s1 + $0x20] sm:$0xff]
  %v29 = vld [vmem:[%s1 + $0x28] sm:$0xff]
  %v30 = vld [vmem:[%s1 + $0x30] sm:$0xff]
  %v31 = vld [vmem:[%s1 + $0x38] sm:$0xff]
  %v32 = vld [vmem:[%s1 + $0x40] sm:$0xff]
  %v33 = vld [vmem:[%s1 + $0x48] sm:$0xff]
  %v34 = vld [vmem:[%s1 + $0x50] sm:$0xff]
  %v35 = vld [vmem:[%s1 + $0x58] sm:$0xff]
  %v36 = vld [vmem:[%s1 + $0x60] sm:$0xff]
  %v37 = vld [vmem:[%s1 + $0x68] sm:$0xff]
  %v38 = vld [vmem:[%s1 + $0x70] sm:$0xff]
  %v39 = vld [vmem:[%s1 + $0x78] sm:$0xff]
  %40 = vmatprep.subr.mxu0 0.0
  %41 = vmatpush1.msra.mxu0 %v24
  %42 = vmatprep.subr.mxu0 0.0
  %43 = vmatpush1.msra.mxu0 %v25
  %44 = vmatprep.subr.mxu0 0.0
  %45 = vmatpush1.msra.mxu0 %v26
  %46 = vmatprep.subr.mxu0 0.0
  %47 = vmatpush1.msra.mxu0 %v27
  %48 = vmatprep.subr.mxu0 0.0
  %49 = vmatpush1.msra.mxu0 %v28
  %50 = vmatprep.subr.mxu0 0.0
  %51 = vmatpush1.msra.mxu0 %v29
  %52 = vmatprep.subr.mxu0 0.0
  %53 = vmatpush1.msra.mxu0 %v30
  %54 = vmatprep.subr.mxu0 0.0
  %55 = vmatpush1.msra.mxu0 %v31
  %56 = vmatprep.subr.mxu0 0.0
  %57 = vmatpush1.msra.mxu0 %v32
  %58 = vmatprep.subr.mxu0 0.0
  %59 = vmatpush1.msra.mxu0 %v33
  %60 = vmatprep.subr.mxu0 0.0
  %61 = vmatpush1.msra.mxu0 %v34
  %62 = vmatprep.subr.mxu0 0.0
  %63 = vmatpush1.msra.mxu0 %v35
  %64 = vmatprep.subr.mxu0 0.0
  %65 = vmatpush1.msra.mxu0 %v36
  %66 = vmatprep.subr.mxu0 0.0
  %67 = vmatpush1.msra.mxu0 %v37
  %68 = vmatprep.subr.mxu0 0.0
  %69 = vmatpush1.msra.mxu0 %v38
  %70 = vmatprep.subr.mxu0 0.0
  %71 = vmatpush1.msra.mxu0 %v39
  %72 = vmatprep.subr.mxu0 0.0
  %73 = vmatpush1.msra.mxu0 0.0
  %74 = vmatprep.subr.mxu0 0.0
  %75 = vmatpush1.msra.mxu0 0.0
  %76 = vmatprep.subr.mxu0 0.0
  %77 = vmatpush1.msra.mxu0 0.0
  %78 = vmatprep.subr.mxu0 0.0
  %79 = vmatpush1.msra.mxu0 0.0
  %80 = vmatprep.subr.mxu0 0.0
  %81 = vmatpush1.msra.mxu0 0.0
  %82 = vmatprep.subr.mxu0 0.0
  %83 = vmatpush1.msra.mxu0 0.0
  %84 = vmatprep.subr.mxu0 0.0
  %85 = vmatpush1.msra.mxu0 0.0
  %86 = vmatprep.subr.mxu0 0.0
  %87 = vmatpush1.msra.mxu0 0.0
  %88 = vmatprep.subr.mxu0 0.0
  %89 = vmatpush1.msra.mxu0 0.0
  %90 = vmatprep.subr.mxu0 0.0
  %91 = vmatpush1.msra.mxu0 0.0
  %92 = vmatprep.subr.mxu0 0.0
  %93 = vmatpush1.msra.mxu0 0.0
  %94 = vmatprep.subr.mxu0 0.0
  %95 = vmatpush1.msra.mxu0 0.0
  %96 = vmatprep.subr.mxu0 0.0
  %97 = vmatpush1.msra.mxu0 0.0
  %98 = vmatprep.subr.mxu0 0.0
  %99 = vmatpush1.msra.mxu0 0.0
  %100 = vmatprep.subr.mxu0 0.0
  %101 = vmatpush1.msra.mxu0 0.0
  %102 = vmatprep.subr.mxu0 0.0
  %103 = vmatpush1.msra.mxu0 0.0
  %104 = vmatprep.mubr.f32.mxu0 0.0
  %105 = vmatmul.mubr.f32.gmra.mrb[0].mxu0 %v22
  %v106 = vpop.f32.mrb[0].mxu0
  %v107 = vadd.f32 0.0, %v106
  %v108 = vpop.f32.mrb[0].mxu0
  %109 = vdwg.mxu0
  %v110 = vadd.f32 %v23, %v107
  %v111 = vtanh.pop %v110
  %112 = vst [vmem:[#allocation3] sm:$0xff] %v111
  %s113 = scalar_lea.vmem %s0, 8
  %v114 = vld [vmem:[%s113] sm:$0xff]
  %v115 = vld [vmem:[%s1] sm:$0xff]
  %v116 = vld [vmem:[%s1 + $0x8] sm:$0xff]
  %v117 = vld [vmem:[%s1 + $0x10] sm:$0xff]
  %v118 = vld [vmem:[%s1 + $0x18] sm:$0xff]
  %v119 = vld [vmem:[%s1 + $0x20] sm:$0xff]
  %v120 = vld [vmem:[%s1 + $0x28] sm:$0xff]
  %v121 = vld [vmem:[%s1 + $0x30] sm:$0xff]
  %v122 = vld [vmem:[%s1 + $0x38] sm:$0xff]
  %v123 = vld [vmem:[%s1 + $0x40] sm:$0xff]
  %v124 = vld [vmem:[%s1 + $0x48] sm:$0xff]
  %v125 = vld [vmem:[%s1 + $0x50] sm:$0xff]
  %v126 = vld [vmem:[%s1 + $0x58] sm:$0xff]
  %v127 = vld [vmem:[%s1 + $0x60] sm:$0xff]
  %v128 = vld [vmem:[%s1 + $0x68] sm:$0xff]
  %v129 = vld [vmem:[%s1 + $0x70] sm:$0xff]
  %v130 = vld [vmem:[%s1 + $0x78] sm:$0xff]
  %131 = vmatprep.subr.mxu0 0.0
  %132 = vmatpush1.msra.mxu0 %v115
  %133 = vmatprep.subr.mxu0 0.0
  %134 = vmatpush1.msra.mxu0 %v116
  %135 = vmatprep.subr.mxu0 0.0
  %136 = vmatpush1.msra.mxu0 %v117
  %137 = vmatprep.subr.mxu0 0.0
  %138 = vmatpush1.msra.mxu0 %v118
  %139 = vmatprep.subr.mxu0 0.0
  %140 = vmatpush1.msra.mxu0 %v119
  %141 = vmatprep.subr.mxu0 0.0
  %142 = vmatpush1.msra.mxu0 %v120
  %143 = vmatprep.subr.mxu0 0.0
  %144 = vmatpush1.msra.mxu0 %v121
  %145 = vmatprep.subr.mxu0 0.0
  %146 = vmatpush1.msra.mxu0 %v122
  %147 = vmatprep.subr.mxu0 0.0
  %148 = vmatpush1.msra.mxu0 %v123
  %149 = vmatprep.subr.mxu0 0.0
  %150 = vmatpush1.msra.mxu0 %v124
  %151 = vmatprep.subr.mxu0 0.0
  %152 = vmatpush1.msra.mxu0 %v125
  %153 = vmatprep.subr.mxu0 0.0
  %154 = vmatpush1.msra.mxu0 %v126
  %155 = vmatprep.subr.mxu0 0.0
  %156 = vmatpush1.msra.mxu0 %v127
  %157 = vmatprep.subr.mxu0 0.0
  %158 = vmatpush1.msra.mxu0 %v128
  %159 = vmatprep.subr.mxu0 0.0
  %160 = vmatpush1.msra.mxu0 %v129
  %161 = vmatprep.subr.mxu0 0.0
  %162 = vmatpush1.msra.mxu0 %v130
  %163 = vmatprep.subr.mxu0 0.0
  %164 = vmatpush1.msra.mxu0 0.0
  %165 = vmatprep.subr.mxu0 0.0
  %166 = vmatpush1.msra.mxu0 0.0
  %167 = vmatprep.subr.mxu0 0.0
  %168 = vmatpush1.msra.mxu0 0.0
  %169 = vmatprep.subr.mxu0 0.0
  %170 = vmatpush1.msra.mxu0 0.0
  %171 = vmatprep.subr.mxu0 0.0
  %172 = vmatpush1.msra.mxu0 0.0
  %173 = vmatprep.subr.mxu0 0.0
  %174 = vmatpush1.msra.mxu0 0.0
  %175 = vmatprep.subr.mxu0 0.0
  %176 = vmatpush1.msra.mxu0 0.0
  %177 = vmatprep.subr.mxu0 0.0
  %178 = vmatpush1.msra.mxu0 0.0
  %179 = vmatprep.subr.mxu0 0.0
  %180 = vmatpush1.msra.mxu0 0.0
  %181 = vmatprep.subr.mxu0 0.0
  %182 = vmatpush1.msra.mxu0 0.0
  %183 = vmatprep.subr.mxu0 0.0
  %184 = vmatpush1.msra.mxu0 0.0
  %185 = vmatprep.subr.mxu0 0.0
  %186 = vmatpush1.msra.mxu0 0.0
  %187 = vmatprep.subr.mxu0 0.0
  %188 = vmatpush1.msra.mxu0 0.0
  %189 = vmatprep.subr.mxu0 0.0
  %190 = vmatpush1.msra.mxu0 0.0
  %191 = vmatprep.subr.mxu0 0.0
  %192 = vmatpush1.msra.mxu0 0.0
  %193 = vmatprep.subr.mxu0 0.0
  %194 = vmatpush1.msra.mxu0 0.0
  %195 = vmatprep.mubr.f32.mxu0 0.0
  %196 = vmatmul.mubr.f32.gmra.mrb[0].mxu0 %v111
  %v197 = vpop.f32.mrb[0].mxu0
  %v198 = vadd.f32 0.0, %v197
  %v199 = vpop.f32.mrb[0].mxu0
  %200 = vdwg.mxu0
  %v201 = vadd.f32 %v114, %v198
  %v202 = vtanh.pop %v201
  %s203 = scalar_lea.vmem [#allocation3], 8
  %204 = vst [vmem:[%s203] sm:$0xff] %v202
  %s205 = scalar_lea.vmem %s0, 16
  %v206 = vld [vmem:[%s205] sm:$0xff]
  %v207 = vld [vmem:[%s1] sm:$0xff]
  %v208 = vld [vmem:[%s1 + $0x8] sm:$0xff]
  %v209 = vld [vmem:[%s1 + $0x10] sm:$0xff]
  %v210 = vld [vmem:[%s1 + $0x18] sm:$0xff]
  %v211 = vld [vmem:[%s1 + $0x20] sm:$0xff]
  %v212 = vld [vmem:[%s1 + $0x28] sm:$0xff]
  %v213 = vld [vmem:[%s1 + $0x30] sm:$0xff]
  %v214 = vld [vmem:[%s1 + $0x38] sm:$0xff]
  %v215 = vld [vmem:[%s1 + $0x40] sm:$0xff]
  %v216 = vld [vmem:[%s1 + $0x48] sm:$0xff]
  %v217 = vld [vmem:[%s1 + $0x50] sm:$0xff]
  %v218 = vld [vmem:[%s1 + $0x58] sm:$0xff]
  %v219 = vld [vmem:[%s1 + $0x60] sm:$0xff]
  %v220 = vld [vmem:[%s1 + $0x68] sm:$0xff]
  %v221 = vld [vmem:[%s1 + $0x70] sm:$0xff]
  %v222 = vld [vmem:[%s1 + $0x78] sm:$0xff]
  %223 = vmatprep.subr.mxu0 0.0
  %224 = vmatpush1.msra.mxu0 %v207
  %225 = vmatprep.subr.mxu0 0.0
  %226 = vmatpush1.msra.mxu0 %v208
  %227 = vmatprep.subr.mxu0 0.0
  %228 = vmatpush1.msra.mxu0 %v209
  %229 = vmatprep.subr.mxu0 0.0
  %230 = vmatpush1.msra.mxu0 %v210
  %231 = vmatprep.subr.mxu0 0.0
  %232 = vmatpush1.msra.mxu0 %v211
  %233 = vmatprep.subr.mxu0 0.0
  %234 = vmatpush1.msra.mxu0 %v212
  %235 = vmatprep.subr.mxu0 0.0
  %236 = vmatpush1.msra.mxu0 %v213
  %237 = vmatprep.subr.mxu0 0.0
  %238 = vmatpush1.msra.mxu0 %v214
  %239 = vmatprep.subr.mxu0 0.0
  %240 = vmatpush1.msra.mxu0 %v215
  %241 = vmatprep.subr.mxu0 0.0
  %242 = vmatpush1.msra.mxu0 %v216
  %243 = vmatprep.subr.mxu0 0.0
  %244 = vmatpush1.msra.mxu0 %v217
  %245 = vmatprep.subr.mxu0 0.0
  %246 = vmatpush1.msra.mxu0 %v218
  %247 = vmatprep.subr.mxu0 0.0
  %248 = vmatpush1.msra.mxu0 %v219
  %249 = vmatprep.subr.mxu0 0.0
  %250 = vmatpush1.msra.mxu0 %v220
  %251 = vmatprep.subr.mxu0 0.0
  %252 = vmatpush1.msra.mxu0 %v221
  %253 = vmatprep.subr.mxu0 0.0
  %254 = vmatpush1.msra.mxu0 %v222
  %255 = vmatprep.subr.mxu0 0.0
  %256 = vmatpush1.msra.mxu0 0.0
  %257 = vmatprep.subr.mxu0 0.0
  %258 = vmatpush1.msra.mxu0 0.0
  %259 = vmatprep.subr.mxu0 0.0
  %260 = vmatpush1.msra.mxu0 0.0
  %261 = vmatprep.subr.mxu0 0.0
  %262 = vmatpush1.msra.mxu0 0.0
  %263 = vmatprep.subr.mxu0 0.0
  %264 = vmatpush1.msra.mxu0 0.0
  %265 = vmatprep.subr.mxu0 0.0
  %266 = vmatpush1.msra.mxu0 0.0
  %267 = vmatprep.subr.mxu0 0.0
  %268 = vmatpush1.msra.mxu0 0.0
  %269 = vmatprep.subr.mxu0 0.0
  %270 = vmatpush1.msra.mxu0 0.0
  %271 = vmatprep.subr.mxu0 0.0
  %272 = vmatpush1.msra.mxu0 0.0
  %273 = vmatprep.subr.mxu0 0.0
  %274 = vmatpush1.msra.mxu0 0.0
  %275 = vmatprep.subr.mxu0 0.0
  %276 = vmatpush1.msra.mxu0 0.0
  %277 = vmatprep.subr.mxu0 0.0
  %278 = vmatpush1.msra.mxu0 0.0
  %279 = vmatprep.subr.mxu0 0.0
  %280 = vmatpush1.msra.mxu0 0.0
  %281 = vmatprep.subr.mxu0 0.0
  %282 = vmatpush1.msra.mxu0 0.0
  %283 = vmatprep.subr.mxu0 0.0
  %284 = vmatpush1.msra.mxu0 0.0
  %285 = vmatprep.subr.mxu0 0.0
  %286 = vmatpush1.msra.mxu0 0.0
  %287 = vmatprep.mubr.f32.mxu0 0.0
  %288 = vmatmul.mubr.f32.gmra.mrb[0].mxu0 %v202
  %v289 = vpop.f32.mrb[0].mxu0
  %v290 = vadd.f32 0.0, %v289
  %v291 = vpop.f32.mrb[0].mxu0
  %292 = vdwg.mxu0
  %v293 = vadd.f32 %v206, %v290
  %v294 = vtanh.pop %v293
  %s295 = scalar_lea.vmem [#allocation3], 16
  %296 = vst [vmem:[%s295] sm:$0xff] %v294
  %s297 = scalar_lea.vmem %s0, 24
  %v298 = vld [vmem:[%s297] sm:$0xff]
  %v299 = vld [vmem:[%s1] sm:$0xff]
  %v300 = vld [vmem:[%s1 + $0x8] sm:$0xff]
  %v301 = vld [vmem:[%s1 + $0x10] sm:$0xff]
  %v302 = vld [vmem:[%s1 + $0x18] sm:$0xff]
  %v303 = vld [vmem:[%s1 + $0x20] sm:$0xff]
  %v304 = vld [vmem:[%s1 + $0x28] sm:$0xff]
  %v305 = vld [vmem:[%s1 + $0x30] sm:$0xff]
  %v306 = vld [vmem:[%s1 + $0x38] sm:$0xff]
  %v307 = vld [vmem:[%s1 + $0x40] sm:$0xff]
  %v308 = vld [vmem:[%s1 + $0x48] sm:$0xff]
  %v309 = vld [vmem:[%s1 + $0x50] sm:$0xff]
  %v310 = vld [vmem:[%s1 + $0x58] sm:$0xff]
  %v311 = vld [vmem:[%s1 + $0x60] sm:$0xff]
  %v312 = vld [vmem:[%s1 + $0x68] sm:$0xff]
  %v313 = vld [vmem:[%s1 + $0x70] sm:$0xff]
  %v314 = vld [vmem:[%s1 + $0x78] sm:$0xff]
  %315 = vmatprep.subr.mxu0 0.0
  %316 = vmatpush1.msra.mxu0 %v299
  %317 = vmatprep.subr.mxu0 0.0
  %318 = vmatpush1.msra.mxu0 %v300
  %319 = vmatprep.subr.mxu0 0.0
  %320 = vmatpush1.msra.mxu0 %v301
  %321 = vmatprep.subr.mxu0 0.0
  %322 = vmatpush1.msra.mxu0 %v302
  %323 = vmatprep.subr.mxu0 0.0
  %324 = vmatpush1.msra.mxu0 %v303
  %325 = vmatprep.subr.mxu0 0.0
  %326 = vmatpush1.msra.mxu0 %v304
  %327 = vmatprep.subr.mxu0 0.0
  %328 = vmatpush1.msra.mxu0 %v305
  %329 = vmatprep.subr.mxu0 0.0
  %330 = vmatpush1.msra.mxu0 %v306
  %331 = vmatprep.subr.mxu0 0.0
  %332 = vmatpush1.msra.mxu0 %v307
  %333 = vmatprep.subr.mxu0 0.0
  %334 = vmatpush1.msra.mxu0 %v308
  %335 = vmatprep.subr.mxu0 0.0
  %336 = vmatpush1.msra.mxu0 %v309
  %337 = vmatprep.subr.mxu0 0.0
  %338 = vmatpush1.msra.mxu0 %v310
  %339 = vmatprep.subr.mxu0 0.0
  %340 = vmatpush1.msra.mxu0 %v311
  %341 = vmatprep.subr.mxu0 0.0
  %342 = vmatpush1.msra.mxu0 %v312
  %343 = vmatprep.subr.mxu0 0.0
  %344 = vmatpush1.msra.mxu0 %v313
  %345 = vmatprep.subr.mxu0 0.0
  %346 = vmatpush1.msra.mxu0 %v314
  %347 = vmatprep.subr.mxu0 0.0
  %348 = vmatpush1.msra.mxu0 0.0
  %349 = vmatprep.subr.mxu0 0.0
  %350 = vmatpush1.msra.mxu0 0.0
  %351 = vmatprep.subr.mxu0 0.0
  %352 = vmatpush1.msra.mxu0 0.0
  %353 = vmatprep.subr.mxu0 0.0
  %354 = vmatpush1.msra.mxu0 0.0
  %355 = vmatprep.subr.mxu0 0.0
  %356 = vmatpush1.msra.mxu0 0.0
  %357 = vmatprep.subr.mxu0 0.0
  %358 = vmatpush1.msra.mxu0 0.0
  %359 = vmatprep.subr.mxu0 0.0
  %360 = vmatpush1.msra.mxu0 0.0
  %361 = vmatprep.subr.mxu0 0.0
  %362 = vmatpush1.msra.mxu0 0.0
  %363 = vmatprep.subr.mxu0 0.0
  %364 = vmatpush1.msra.mxu0 0.0
  %365 = vmatprep.subr.mxu0 0.0
  %366 = vmatpush1.msra.mxu0 0.0
  %367 = vmatprep.subr.mxu0 0.0
  %368 = vmatpush1.msra.mxu0 0.0
  %369 = vmatprep.subr.mxu0 0.0
  %370 = vmatpush1.msra.mxu0 0.0
  %371 = vmatprep.subr.mxu0 0.0
  %372 = vmatpush1.msra.mxu0 0.0
  %373 = vmatprep.subr.mxu0 0.0
  %374 = vmatpush1.msra.mxu0 0.0
  %375 = vmatprep.subr.mxu0 0.0
  %376 = vmatpush1.msra.mxu0 0.0
  %377 = vmatprep.subr.mxu0 0.0
  %378 = vmatpush1.msra.mxu0 0.0
  %379 = vmatprep.mubr.f32.mxu0 0.0
  %380 = vmatmul.mubr.f32.gmra.mrb[0].mxu0 %v294
  %v381 = vpop.f32.mrb[0].mxu0
  %v382 = vadd.f32 0.0, %v381
  %v383 = vpop.f32.mrb[0].mxu0
  %384 = vdwg.mxu0
  %v385 = vadd.f32 %v298, %v382
  %v386 = vtanh.pop %v385
  %s387 = scalar_lea.vmem [#allocation3], 24
  %388 = vst [vmem:[%s387] sm:$0xff] %v386
  %s389 = scalar_lea.vmem %s0, 32
  %v390 = vld [vmem:[%s389] sm:$0xff]
  %v391 = vld [vmem:[%s1] sm:$0xff]
  %v392 = vld [vmem:[%s1 + $0x8] sm:$0xff]
  %v393 = vld [vmem:[%s1 + $0x10] sm:$0xff]
  %v394 = vld [vmem:[%s1 + $0x18] sm:$0xff]
  %v395 = vld [vmem:[%s1 + $0x20] sm:$0xff]
  %v396 = vld [vmem:[%s1 + $0x28] sm:$0xff]
  %v397 = vld [vmem:[%s1 + $0x30] sm:$0xff]
  %v398 = vld [vmem:[%s1 + $0x38] sm:$0xff]
  %v399 = vld [vmem:[%s1 + $0x40] sm:$0xff]
  %v400 = vld [vmem:[%s1 + $0x48] sm:$0xff]
  %v401 = vld [vmem:[%s1 + $0x50] sm:$0xff]
  %v402 = vld [vmem:[%s1 + $0x58] sm:$0xff]
  %v403 = vld [vmem:[%s1 + $0x60] sm:$0xff]
  %v404 = vld [vmem:[%s1 + $0x68] sm:$0xff]
  %v405 = vld [vmem:[%s1 + $0x70] sm:$0xff]
  %v406 = vld [vmem:[%s1 + $0x78] sm:$0xff]
  %407 = vmatprep.subr.mxu0 0.0
  %408 = vmatpush1.msra.mxu0 %v391
  %409 = vmatprep.subr.mxu0 0.0
  %410 = vmatpush1.msra.mxu0 %v392
  %411 = vmatprep.subr.mxu0 0.0
  %412 = vmatpush1.msra.mxu0 %v393
  %413 = vmatprep.subr.mxu0 0.0
  %414 = vmatpush1.msra.mxu0 %v394
  %415 = vmatprep.subr.mxu0 0.0
  %416 = vmatpush1.msra.mxu0 %v395
  %417 = vmatprep.subr.mxu0 0.0
  %418 = vmatpush1.msra.mxu0 %v396
  %419 = vmatprep.subr.mxu0 0.0
  %420 = vmatpush1.msra.mxu0 %v397
  %421 = vmatprep.subr.mxu0 0.0
  %422 = vmatpush1.msra.mxu0 %v398
  %423 = vmatprep.subr.mxu0 0.0
  %424 = vmatpush1.msra.mxu0 %v399
  %425 = vmatprep.subr.mxu0 0.0
  %426 = vmatpush1.msra.mxu0 %v400
  %427 = vmatprep.subr.mxu0 0.0
  %428 = vmatpush1.msra.mxu0 %v401
  %429 = vmatprep.subr.mxu0 0.0
  %430 = vmatpush1.msra.mxu0 %v402
  %431 = vmatprep.subr.mxu0 0.0
  %432 = vmatpush1.msra.mxu0 %v403
  %433 = vmatprep.subr.mxu0 0.0
  %434 = vmatpush1.msra.mxu0 %v404
  %435 = vmatprep.subr.mxu0 0.0
  %436 = vmatpush1.msra.mxu0 %v405
  %437 = vmatprep.subr.mxu0 0.0
  %438 = vmatpush1.msra.mxu0 %v406
  %439 = vmatprep.subr.mxu0 0.0
  %440 = vmatpush1.msra.mxu0 0.0
  %441 = vmatprep.subr.mxu0 0.0
  %442 = vmatpush1.msra.mxu0 0.0
  %443 = vmatprep.subr.mxu0 0.0
  %444 = vmatpush1.msra.mxu0 0.0
  %445 = vmatprep.subr.mxu0 0.0
  %446 = vmatpush1.msra.mxu0 0.0
  %447 = vmatprep.subr.mxu0 0.0
  %448 = vmatpush1.msra.mxu0 0.0
  %449 = vmatprep.subr.mxu0 0.0
  %450 = vmatpush1.msra.mxu0 0.0
  %451 = vmatprep.subr.mxu0 0.0
  %452 = vmatpush1.msra.mxu0 0.0
  %453 = vmatprep.subr.mxu0 0.0
  %454 = vmatpush1.msra.mxu0 0.0
  %455 = vmatprep.subr.mxu0 0.0
  %456 = vmatpush1.msra.mxu0 0.0
  %457 = vmatprep.subr.mxu0 0.0
  %458 = vmatpush1.msra.mxu0 0.0
  %459 = vmatprep.subr.mxu0 0.0
  %460 = vmatpush1.msra.mxu0 0.0
  %461 = vmatprep.subr.mxu0 0.0
  %462 = vmatpush1.msra.mxu0 0.0
  %463 = vmatprep.subr.mxu0 0.0
  %464 = vmatpush1.msra.mxu0 0.0
  %465 = vmatprep.subr.mxu0 0.0
  %466 = vmatpush1.msra.mxu0 0.0
  %467 = vmatprep.subr.mxu0 0.0
  %468 = vmatpush1.msra.mxu0 0.0
  %469 = vmatprep.subr.mxu0 0.0
  %470 = vmatpush1.msra.mxu0 0.0
  %471 = vmatprep.mubr.f32.mxu0 0.0
  %472 = vmatmul.mubr.f32.gmra.mrb[0].mxu0 %v386
  %v473 = vpop.f32.mrb[0].mxu0
  %v474 = vadd.f32 0.0, %v473
  %v475 = vpop.f32.mrb[0].mxu0
  %476 = vdwg.mxu0
  %v477 = vadd.f32 %v390, %v474
  %v478 = vtanh.pop %v477
  %s479 = scalar_lea.vmem [#allocation3], 32
  %480 = vst [vmem:[%s479] sm:$0xff] %v478
  %s481 = scalar_lea.vmem %s0, 40
  %v482 = vld [vmem:[%s481] sm:$0xff]
  %v483 = vld [vmem:[%s1] sm:$0xff]
  %v484 = vld [vmem:[%s1 + $0x8] sm:$0xff]
  %v485 = vld [vmem:[%s1 + $0x10] sm:$0xff]
  %v486 = vld [vmem:[%s1 + $0x18] sm:$0xff]
  %v487 = vld [vmem:[%s1 + $0x20] sm:$0xff]
  %v488 = vld [vmem:[%s1 + $0x28] sm:$0xff]
  %v489 = vld [vmem:[%s1 + $0x30] sm:$0xff]
  %v490 = vld [vmem:[%s1 + $0x38] sm:$0xff]
  %v491 = vld [vmem:[%s1 + $0x40] sm:$0xff]
  %v492 = vld [vmem:[%s1 + $0x48] sm:$0xff]
  %v493 = vld [vmem:[%s1 + $0x50] sm:$0xff]
  %v494 = vld [vmem:[%s1 + $0x58] sm:$0xff]
  %v495 = vld [vmem:[%s1 + $0x60] sm:$0xff]
  %v496 = vld [vmem:[%s1 + $0x68] sm:$0xff]
  %v497 = vld [vmem:[%s1 + $0x70] sm:$0xff]
  %v498 = vld [vmem:[%s1 + $0x78] sm:$0xff]
  %499 = vmatprep.subr.mxu0 0.0
  %500 = vmatpush1.msra.mxu0 %v483
  %501 = vmatprep.subr.mxu0 0.0
  %502 = vmatpush1.msra.mxu0 %v484
  %503 = vmatprep.subr.mxu0 0.0
  %504 = vmatpush1.msra.mxu0 %v485
  %505 = vmatprep.subr.mxu0 0.0
  %506 = vmatpush1.msra.mxu0 %v486
  %507 = vmatprep.subr.mxu0 0.0
  %508 = vmatpush1.msra.mxu0 %v487
  %509 = vmatprep.subr.mxu0 0.0
  %510 = vmatpush1.msra.mxu0 %v488
  %511 = vmatprep.subr.mxu0 0.0
  %512 = vmatpush1.msra.mxu0 %v489
  %513 = vmatprep.subr.mxu0 0.0
  %514 = vmatpush1.msra.mxu0 %v490
  %515 = vmatprep.subr.mxu0 0.0
  %516 = vmatpush1.msra.mxu0 %v491
  %517 = vmatprep.subr.mxu0 0.0
  %518 = vmatpush1.msra.mxu0 %v492
  %519 = vmatprep.subr.mxu0 0.0
  %520 = vmatpush1.msra.mxu0 %v493
  %521 = vmatprep.subr.mxu0 0.0
  %522 = vmatpush1.msra.mxu0 %v494
  %523 = vmatprep.subr.mxu0 0.0
  %524 = vmatpush1.msra.mxu0 %v495
  %525 = vmatprep.subr.mxu0 0.0
  %526 = vmatpush1.msra.mxu0 %v496
  %527 = vmatprep.subr.mxu0 0.0
  %528 = vmatpush1.msra.mxu0 %v497
  %529 = vmatprep.subr.mxu0 0.0
  %530 = vmatpush1.msra.mxu0 %v498
  %531 = vmatprep.subr.mxu0 0.0
  %532 = vmatpush1.msra.mxu0 0.0
  %533 = vmatprep.subr.mxu0 0.0
  %534 = vmatpush1.msra.mxu0 0.0
  %535 = vmatprep.subr.mxu0 0.0
  %536 = vmatpush1.msra.mxu0 0.0
  %537 = vmatprep.subr.mxu0 0.0
  %538 = vmatpush1.msra.mxu0 0.0
  %539 = vmatprep.subr.mxu0 0.0
  %540 = vmatpush1.msra.mxu0 0.0
  %541 = vmatprep.subr.mxu0 0.0
  %542 = vmatpush1.msra.mxu0 0.0
  %543 = vmatprep.subr.mxu0 0.0
  %544 = vmatpush1.msra.mxu0 0.0
  %545 = vmatprep.subr.mxu0 0.0
  %546 = vmatpush1.msra.mxu0 0.0
  %547 = vmatprep.subr.mxu0 0.0
  %548 = vmatpush1.msra.mxu0 0.0
  %549 = vmatprep.subr.mxu0 0.0
  %550 = vmatpush1.msra.mxu0 0.0
  %551 = vmatprep.subr.mxu0 0.0
  %552 = vmatpush1.msra.mxu0 0.0
  %553 = vmatprep.subr.mxu0 0.0
  %554 = vmatpush1.msra.mxu0 0.0
  %555 = vmatprep.subr.mxu0 0.0
  %556 = vmatpush1.msra.mxu0 0.0
  %557 = vmatprep.subr.mxu0 0.0
  %558 = vmatpush1.msra.mxu0 0.0
  %559 = vmatprep.subr.mxu0 0.0
  %560 = vmatpush1.msra.mxu0 0.0
  %561 = vmatprep.subr.mxu0 0.0
  %562 = vmatpush1.msra.mxu0 0.0
  %563 = vmatprep.mubr.f32.mxu0 0.0
  %564 = vmatmul.mubr.f32.gmra.mrb[0].mxu0 %v478
  %v565 = vpop.f32.mrb[0].mxu0
  %v566 = vadd.f32 0.0, %v565
  %v567 = vpop.f32.mrb[0].mxu0
  %568 = vdwg.mxu0
  %v569 = vadd.f32 %v482, %v566
  %v570 = vtanh.pop %v569
  %s571 = scalar_lea.vmem [#allocation3], 40
  %572 = vst [vmem:[%s571] sm:$0xff] %v570
  %s573 = scalar_lea.vmem %s0, 48
  %v574 = vld [vmem:[%s573] sm:$0xff]
  %v575 = vld [vmem:[%s1] sm:$0xff]
  %v576 = vld [vmem:[%s1 + $0x8] sm:$0xff]
  %v577 = vld [vmem:[%s1 + $0x10] sm:$0xff]
  %v578 = vld [vmem:[%s1 + $0x18] sm:$0xff]
  %v579 = vld [vmem:[%s1 + $0x20] sm:$0xff]
  %v580 = vld [vmem:[%s1 + $0x28] sm:$0xff]
  %v581 = vld [vmem:[%s1 + $0x30] sm:$0xff]
  %v582 = vld [vmem:[%s1 + $0x38] sm:$0xff]
  %v583 = vld [vmem:[%s1 + $0x40] sm:$0xff]
  %v584 = vld [vmem:[%s1 + $0x48] sm:$0xff]
  %v585 = vld [vmem:[%s1 + $0x50] sm:$0xff]
  %v586 = vld [vmem:[%s1 + $0x58] sm:$0xff]
  %v587 = vld [vmem:[%s1 + $0x60] sm:$0xff]
  %v588 = vld [vmem:[%s1 + $0x68] sm:$0xff]
  %v589 = vld [vmem:[%s1 + $0x70] sm:$0xff]
  %v590 = vld [vmem:[%s1 + $0x78] sm:$0xff]
  %591 = vmatprep.subr.mxu0 0.0
  %592 = vmatpush1.msra.mxu0 %v575
  %593 = vmatprep.subr.mxu0 0.0
  %594 = vmatpush1.msra.mxu0 %v576
  %595 = vmatprep.subr.mxu0 0.0
  %596 = vmatpush1.msra.mxu0 %v577
  %597 = vmatprep.subr.mxu0 0.0
  %598 = vmatpush1.msra.mxu0 %v578
  %599 = vmatprep.subr.mxu0 0.0
  %600 = vmatpush1.msra.mxu0 %v579
  %601 = vmatprep.subr.mxu0 0.0
  %602 = vmatpush1.msra.mxu0 %v580
  %603 = vmatprep.subr.mxu0 0.0
  %604 = vmatpush1.msra.mxu0 %v581
  %605 = vmatprep.subr.mxu0 0.0
  %606 = vmatpush1.msra.mxu0 %v582
  %607 = vmatprep.subr.mxu0 0.0
  %608 = vmatpush1.msra.mxu0 %v583
  %609 = vmatprep.subr.mxu0 0.0
  %610 = vmatpush1.msra.mxu0 %v584
  %611 = vmatprep.subr.mxu0 0.0
  %612 = vmatpush1.msra.mxu0 %v585
  %613 = vmatprep.subr.mxu0 0.0
  %614 = vmatpush1.msra.mxu0 %v586
  %615 = vmatprep.subr.mxu0 0.0
  %616 = vmatpush1.msra.mxu0 %v587
  %617 = vmatprep.subr.mxu0 0.0
  %618 = vmatpush1.msra.mxu0 %v588
  %619 = vmatprep.subr.mxu0 0.0
  %620 = vmatpush1.msra.mxu0 %v589
  %621 = vmatprep.subr.mxu0 0.0
  %622 = vmatpush1.msra.mxu0 %v590
  %623 = vmatprep.subr.mxu0 0.0
  %624 = vmatpush1.msra.mxu0 0.0
  %625 = vmatprep.subr.mxu0 0.0
  %626 = vmatpush1.msra.mxu0 0.0
  %627 = vmatprep.subr.mxu0 0.0
  %628 = vmatpush1.msra.mxu0 0.0
  %629 = vmatprep.subr.mxu0 0.0
  %630 = vmatpush1.msra.mxu0 0.0
  %631 = vmatprep.subr.mxu0 0.0
  %632 = vmatpush1.msra.mxu0 0.0
  %633 = vmatprep.subr.mxu0 0.0
  %634 = vmatpush1.msra.mxu0 0.0
  %635 = vmatprep.subr.mxu0 0.0
  %636 = vmatpush1.msra.mxu0 0.0
  %637 = vmatprep.subr.mxu0 0.0
  %638 = vmatpush1.msra.mxu0 0.0
  %639 = vmatprep.subr.mxu0 0.0
  %640 = vmatpush1.msra.mxu0 0.0
  %641 = vmatprep.subr.mxu0 0.0
  %642 = vmatpush1.msra.mxu0 0.0
  %643 = vmatprep.subr.mxu0 0.0
  %644 = vmatpush1.msra.mxu0 0.0
  %645 = vmatprep.subr.mxu0 0.0
  %646 = vmatpush1.msra.mxu0 0.0
  %647 = vmatprep.subr.mxu0 0.0
  %648 = vmatpush1.msra.mxu0 0.0
  %649 = vmatprep.subr.mxu0 0.0
  %650 = vmatpush1.msra.mxu0 0.0
  %651 = vmatprep.subr.mxu0 0.0
  %652 = vmatpush1.msra.mxu0 0.0
  %653 = vmatprep.subr.mxu0 0.0
  %654 = vmatpush1.msra.mxu0 0.0
  %655 = vmatprep.mubr.f32.mxu0 0.0
  %656 = vmatmul.mubr.f32.gmra.mrb[0].mxu0 %v570
  %v657 = vpop.f32.mrb[0].mxu0
  %v658 = vadd.f32 0.0, %v657
  %v659 = vpop.f32.mrb[0].mxu0
  %660 = vdwg.mxu0
  %v661 = vadd.f32 %v574, %v658
  %v662 = vtanh.pop %v661
  %s663 = scalar_lea.vmem [#allocation3], 48
  %664 = vst [vmem:[%s663] sm:$0xff] %v662
  %s665 = scalar_lea.vmem %s0, 56
  %v666 = vld [vmem:[%s665] sm:$0xff]
  %v667 = vld [vmem:[%s1] sm:$0xff]
  %v668 = vld [vmem:[%s1 + $0x8] sm:$0xff]
  %v669 = vld [vmem:[%s1 + $0x10] sm:$0xff]
  %v670 = vld [vmem:[%s1 + $0x18] sm:$0xff]
  %v671 = vld [vmem:[%s1 + $0x20] sm:$0xff]
  %v672 = vld [vmem:[%s1 + $0x28] sm:$0xff]
  %v673 = vld [vmem:[%s1 + $0x30] sm:$0xff]
  %v674 = vld [vmem:[%s1 + $0x38] sm:$0xff]
  %v675 = vld [vmem:[%s1 + $0x40] sm:$0xff]
  %v676 = vld [vmem:[%s1 + $0x48] sm:$0xff]
  %v677 = vld [vmem:[%s1 + $0x50] sm:$0xff]
  %v678 = vld [vmem:[%s1 + $0x58] sm:$0xff]
  %v679 = vld [vmem:[%s1 + $0x60] sm:$0xff]
  %v680 = vld [vmem:[%s1 + $0x68] sm:$0xff]
  %v681 = vld [vmem:[%s1 + $0x70] sm:$0xff]
  %v682 = vld [vmem:[%s1 + $0x78] sm:$0xff]
  %683 = vmatprep.subr.mxu0 0.0
  %684 = vmatpush1.msra.mxu0 %v667
  %685 = vmatprep.subr.mxu0 0.0
  %686 = vmatpush1.msra.mxu0 %v668
  %687 = vmatprep.subr.mxu0 0.0
  %688 = vmatpush1.msra.mxu0 %v669
  %689 = vmatprep.subr.mxu0 0.0
  %690 = vmatpush1.msra.mxu0 %v670
  %691 = vmatprep.subr.mxu0 0.0
  %692 = vmatpush1.msra.mxu0 %v671
  %693 = vmatprep.subr.mxu0 0.0
  %694 = vmatpush1.msra.mxu0 %v672
  %695 = vmatprep.subr.mxu0 0.0
  %696 = vmatpush1.msra.mxu0 %v673
  %697 = vmatprep.subr.mxu0 0.0
  %698 = vmatpush1.msra.mxu0 %v674
  %699 = vmatprep.subr.mxu0 0.0
  %700 = vmatpush1.msra.mxu0 %v675
  %701 = vmatprep.subr.mxu0 0.0
  %702 = vmatpush1.msra.mxu0 %v676
  %703 = vmatprep.subr.mxu0 0.0
  %704 = vmatpush1.msra.mxu0 %v677
  %705 = vmatprep.subr.mxu0 0.0
  %706 = vmatpush1.msra.mxu0 %v678
  %707 = vmatprep.subr.mxu0 0.0
  %708 = vmatpush1.msra.mxu0 %v679
  %709 = vmatprep.subr.mxu0 0.0
  %710 = vmatpush1.msra.mxu0 %v680
  %711 = vmatprep.subr.mxu0 0.0
  %712 = vmatpush1.msra.mxu0 %v681
  %713 = vmatprep.subr.mxu0 0.0
  %714 = vmatpush1.msra.mxu0 %v682
  %715 = vmatprep.subr.mxu0 0.0
  %716 = vmatpush1.msra.mxu0 0.0
  %717 = vmatprep.subr.mxu0 0.0
  %718 = vmatpush1.msra.mxu0 0.0
  %719 = vmatprep.subr.mxu0 0.0
  %720 = vmatpush1.msra.mxu0 0.0
  %721 = vmatprep.subr.mxu0 0.0
  %722 = vmatpush1.msra.mxu0 0.0
  %723 = vmatprep.subr.mxu0 0.0
  %724 = vmatpush1.msra.mxu0 0.0
  %725 = vmatprep.subr.mxu0 0.0
  %726 = vmatpush1.msra.mxu0 0.0
  %727 = vmatprep.subr.mxu0 0.0
  %728 = vmatpush1.msra.mxu0 0.0
  %729 = vmatprep.subr.mxu0 0.0
  %730 = vmatpush1.msra.mxu0 0.0
  %731 = vmatprep.subr.mxu0 0.0
  %732 = vmatpush1.msra.mxu0 0.0
  %733 = vmatprep.subr.mxu0 0.0
  %734 = vmatpush1.msra.mxu0 0.0
  %735 = vmatprep.subr.mxu0 0.0
  %736 = vmatpush1.msra.mxu0 0.0
  %737 = vmatprep.subr.mxu0 0.0
  %738 = vmatpush1.msra.mxu0 0.0
  %739 = vmatprep.subr.mxu0 0.0
  %740 = vmatpush1.msra.mxu0 0.0
  %741 = vmatprep.subr.mxu0 0.0
  %742 = vmatpush1.msra.mxu0 0.0
  %743 = vmatprep.subr.mxu0 0.0
  %744 = vmatpush1.msra.mxu0 0.0
  %745 = vmatprep.subr.mxu0 0.0
  %746 = vmatpush1.msra.mxu0 0.0
  %747 = vmatprep.mubr.f32.mxu0 0.0
  %748 = vmatmul.mubr.f32.gmra.mrb[0].mxu0 %v662
  %v749 = vpop.f32.mrb[0].mxu0
  %v750 = vadd.f32 0.0, %v749
  %v751 = vpop.f32.mrb[0].mxu0
  %752 = vdwg.mxu0
  %v753 = vadd.f32 %v666, %v750
  %v754 = vtanh.pop %v753
  %s755 = scalar_lea.vmem [#allocation3], 56
  %756 = vst [vmem:[%s755] sm:$0xff] %v754
  %757 = vst [vmem:[#allocation2] sm:$0xff] %v754
  %v758 = vld [vmem:[#allocation3] sm:$0xff]
  %v759 = vld [vmem:[#allocation3 + $0x8] sm:$0xff]
  %v760 = vld [vmem:[#allocation3 + $0x10] sm:$0xff]
  %v761 = vld [vmem:[#allocation3 + $0x18] sm:$0xff]
  %v762 = vld [vmem:[#allocation3 + $0x20] sm:$0xff]
  %v763 = vld [vmem:[#allocation3 + $0x28] sm:$0xff]
  %v764 = vld [vmem:[#allocation3 + $0x30] sm:$0xff]
  %v765 = vld [vmem:[#allocation3 + $0x38] sm:$0xff]
  %v766 = vld [vmem:[%s2] sm:$0xff]
  %v767 = vld [vmem:[%s2 + $0x8] sm:$0xff]
  %v768 = vld [vmem:[%s2 + $0x10] sm:$0xff]
  %v769 = vld [vmem:[%s2 + $0x18] sm:$0xff]
  %v770 = vld [vmem:[%s2 + $0x20] sm:$0xff]
  %v771 = vld [vmem:[%s2 + $0x28] sm:$0xff]
  %v772 = vld [vmem:[%s2 + $0x30] sm:$0xff]
  %v773 = vld [vmem:[%s2 + $0x38] sm:$0xff]
  %v774 = vld [vmem:[%s2 + $0x40] sm:$0xff]
  %v775 = vld [vmem:[%s2 + $0x48] sm:$0xff]
  %v776 = vld [vmem:[%s2 + $0x50] sm:$0xff]
  %v777 = vld [vmem:[%s2 + $0x58] sm:$0xff]
  %v778 = vld [vmem:[%s2 + $0x60] sm:$0xff]
  %v779 = vld [vmem:[%s2 + $0x68] sm:$0xff]
  %v780 = vld [vmem:[%s2 + $0x70] sm:$0xff]
  %v781 = vld [vmem:[%s2 + $0x78] sm:$0xff]
  %v782 = vld [vmem:[%s3] sm:$0x1]
  %v784 = vlaneseq
  %v785 = vshrl.u32 %v784, 7
  %v786 = vsub.s32 0, %v785
  %v787 = vrot.slane %v782, %v786
  %789 = vmatprep.subr.mxu0 0.0
  %790 = vmatpush1.msra.mxu0 %v766
  %791 = vmatprep.subr.mxu0 0.0
  %792 = vmatpush1.msra.mxu0 %v767
  %793 = vmatprep.subr.mxu0 0.0
  %794 = vmatpush1.msra.mxu0 %v768
  %795 = vmatprep.subr.mxu0 0.0
  %796 = vmatpush1.msra.mxu0 %v769
  %797 = vmatprep.subr.mxu0 0.0
  %798 = vmatpush1.msra.mxu0 %v770
  %799 = vmatprep.subr.mxu0 0.0
  %800 = vmatpush1.msra.mxu0 %v771
  %801 = vmatprep.subr.mxu0 0.0
  %802 = vmatpush1.msra.mxu0 %v772
  %803 = vmatprep.subr.mxu0 0.0
  %804 = vmatpush1.msra.mxu0 %v773
  %805 = vmatprep.subr.mxu0 0.0
  %806 = vmatpush1.msra.mxu0 %v774
  %807 = vmatprep.subr.mxu0 0.0
  %808 = vmatpush1.msra.mxu0 %v775
  %809 = vmatprep.subr.mxu0 0.0
  %810 = vmatpush1.msra.mxu0 %v776
  %811 = vmatprep.subr.mxu0 0.0
  %812 = vmatpush1.msra.mxu0 %v777
  %813 = vmatprep.subr.mxu0 0.0
  %814 = vmatpush1.msra.mxu0 %v778
  %815 = vmatprep.subr.mxu0 0.0
  %816 = vmatpush1.msra.mxu0 %v779
  %817 = vmatprep.subr.mxu0 0.0
  %818 = vmatpush1.msra.mxu0 %v780
  %819 = vmatprep.subr.mxu0 0.0
  %820 = vmatpush1.msra.mxu0 %v781
  %821 = vmatprep.subr.mxu0 0.0
  %822 = vmatpush1.msra.mxu0 0.0
  %823 = vmatprep.subr.mxu0 0.0
  %824 = vmatpush1.msra.mxu0 0.0
  %825 = vmatprep.subr.mxu0 0.0
  %826 = vmatpush1.msra.mxu0 0.0
  %827 = vmatprep.subr.mxu0 0.0
  %828 = vmatpush1.msra.mxu0 0.0
  %829 = vmatprep.subr.mxu0 0.0
  %830 = vmatpush1.msra.mxu0 0.0
  %831 = vmatprep.subr.mxu0 0.0
  %832 = vmatpush1.msra.mxu0 0.0
  %833 = vmatprep.subr.mxu0 0.0
  %834 = vmatpush1.msra.mxu0 0.0
  %835 = vmatprep.subr.mxu0 0.0
  %836 = vmatpush1.msra.mxu0 0.0
  %837 = vmatprep.subr.mxu0 0.0
  %838 = vmatpush1.msra.mxu0 0.0
  %839 = vmatprep.subr.mxu0 0.0
  %840 = vmatpush1.msra.mxu0 0.0
  %841 = vmatprep.subr.mxu0 0.0
  %842 = vmatpush1.msra.mxu0 0.0
  %843 = vmatprep.subr.mxu0 0.0
  %844 = vmatpush1.msra.mxu0 0.0
  %845 = vmatprep.subr.mxu0 0.0
  %846 = vmatpush1.msra.mxu0 0.0
  %847 = vmatprep.subr.mxu0 0.0
  %848 = vmatpush1.msra.mxu0 0.0
  %849 = vmatprep.subr.mxu0 0.0
  %850 = vmatpush1.msra.mxu0 0.0
  %851 = vmatprep.subr.mxu0 0.0
  %852 = vmatpush1.msra.mxu0 0.0
  %853 = vmatprep.mubr.f32.mxu0 0.0
  %854 = vmatmul.mubr.f32.gmra.mrb[0].mxu0 %v758
  %v855 = vpop.f32.mrb[0].mxu0
  %v856 = vadd.f32 %v787, %v855
  %v857 = vpop.f32.mrb[0].mxu0
  %858 = vmatprep.mubr.f32.mxu0 0.0
  %859 = vmatmul.mubr.f32.gmra.mrb[0].mxu0 %v759
  %v860 = vpop.f32.mrb[0].mxu0
  %v861 = vadd.f32 %v787, %v860
  %v862 = vpop.f32.mrb[0].mxu0
  %863 = vmatprep.mubr.f32.mxu0 0.0
  %864 = vmatmul.mubr.f32.gmra.mrb[0].mxu0 %v760
  %v865 = vpop.f32.mrb[0].mxu0
  %v866 = vadd.f32 %v787, %v865
  %v867 = vpop.f32.mrb[0].mxu0
  %868 = vmatprep.mubr.f32.mxu0 0.0
  %869 = vmatmul.mubr.f32.gmra.mrb[0].mxu0 %v761
  %v870 = vpop.f32.mrb[0].mxu0
  %v871 = vadd.f32 %v787, %v870
  %v872 = vpop.f32.mrb[0].mxu0
  %873 = vmatprep.mubr.f32.mxu0 0.0
  %874 = vmatmul.mubr.f32.gmra.mrb[0].mxu0 %v762
  %v875 = vpop.f32.mrb[0].mxu0
  %v876 = vadd.f32 %v787, %v875
  %v877 = vpop.f32.mrb[0].mxu0
  %878 = vmatprep.mubr.f32.mxu0 0.0
  %879 = vmatmul.mubr.f32.gmra.mrb[0].mxu0 %v763
  %v880 = vpop.f32.mrb[0].mxu0
  %v881 = vadd.f32 %v787, %v880
  %v882 = vpop.f32.mrb[0].mxu0
  %883 = vmatprep.mubr.f32.mxu0 0.0
  %884 = vmatmul.mubr.f32.gmra.mrb[0].mxu0 %v764
  %v885 = vpop.f32.mrb[0].mxu0
  %v886 = vadd.f32 %v787, %v885
  %v887 = vpop.f32.mrb[0].mxu0
  %888 = vmatprep.mubr.f32.mxu0 0.0
  %889 = vmatmul.mubr.f32.gmra.mrb[0].mxu0 %v765
  %v890 = vpop.f32.mrb[0].mxu0
  %v891 = vadd.f32 %v787, %v890
  %v892 = vpop.f32.mrb[0].mxu0
  %893 = vdwg.mxu0
  %894 = vst [vmem:[%s4] sm:$0xff] %v856
  %895 = vst [vmem:[%s4 + $0x8] sm:$0xff] %v861
  %896 = vst [vmem:[%s4 + $0x10] sm:$0xff] %v866
  %897 = vst [vmem:[%s4 + $0x18] sm:$0xff] %v871
  %898 = vst [vmem:[%s4 + $0x20] sm:$0xff] %v876
  %899 = vst [vmem:[%s4 + $0x28] sm:$0xff] %v881
  %900 = vst [vmem:[%s4 + $0x30] sm:$0xff] %v886
  %901 = vst [vmem:[%s4 + $0x38] sm:$0xff] %v891
  // Predicated region
  $region22: #{rnn_forward.2} parent=0 // pred_check
    _
  $region23: #{rnn_forward.2} parent=0 // pred_check_branch
    %903 = sbr.rel (0) target = $region25
  $region24: #{rnn_forward.2} parent=0 // pred_region
    _
  $region25: #{rnn_forward.2} parent=0 // pred_fallthru
    _
  // Predicated region
  $region26: #{rnn_forward.2} parent=0 // pred_check
    _
  $region27: #{rnn_forward.2} parent=0 // pred_check_branch
    %905 = sbr.rel (0) target = $region29
  $region28: #{rnn_forward.2} parent=0 // pred_region
    _
  $region29: #{rnn_forward.2} parent=0 // pred_fallthru
    _

// kernel: rnn_forward.3
$region0: #{rnn_forward.3}
  #allocation0 [shape = 'u32[]', space=smem, size = 0x4, offset = 0x4, fixed_abs, tag = 'smem constant byte address 0x4 - core index']
  #allocation1 [shape = 'u32[144,128]{1,0:T(1,128)}', space=vmem, size = 0x12000, scoped, tag = 'internal scratch']
  #allocation2 [shape = 'f32[8,128]{1,0:T(8,128)}', space=vmem, size = 0x1000, scoped, tag = 'scratch operand']
  #allocation3 [shape = 'f32[8,8,128]{2,1,0:T(8,128)}', space=vmem, size = 0x8000, scoped, tag = 'scratch operand']
  %s0 = inlined_call_operand.vmem [shape: f32[8,8,128], index: 0, kind: input, shape index: {}]
  %s1 = inlined_call_operand.vmem [shape: f32[128,128], index: 1, kind: input, shape index: {}]
  %s2 = inlined_call_operand.vmem [shape: f32[1,128], index: 2, kind: input, shape index: {}]
  %s3 = inlined_call_operand.vmem [shape: f32[8,8], index: 3, kind: output, shape index: {}]
  %s4 = sld [smem:[#allocation0]]
  $region26: #{rnn_forward.3} parent=0
    _
  %s6 = ssub.s32 1, %s4
  %s7 = scalar_select 0, %s6, %s4
  // Predicated region
  $region2: #{rnn_forward.3} parent=0 // pred_check
    _
  $region3: #{rnn_forward.3} parent=0 // pred_check_branch
    %9 = sbr.rel (0) target = $region5
  $region4: #{rnn_forward.3} parent=0 // pred_region
    _
  $region5: #{rnn_forward.3} parent=0 // pred_fallthru
    _
  // Predicated region
  $region6: #{rnn_forward.3} parent=0 // pred_check
    _
  $region7: #{rnn_forward.3} parent=0 // pred_check_branch
    %11 = sbr.rel (0) target = $region9
  $region8: #{rnn_forward.3} parent=0 // pred_region
    _
  $region9: #{rnn_forward.3} parent=0 // pred_fallthru
    _
  // Predicated region
  $region10: #{rnn_forward.3} parent=0 // pred_check
    _
  $region11: #{rnn_forward.3} parent=0 // pred_check_branch
    %13 = sbr.rel (0) target = $region13
  $region12: #{rnn_forward.3} parent=0 // pred_region
    _
  $region13: #{rnn_forward.3} parent=0 // pred_fallthru
    _
  %p14 = scmp.eq.s32.totalorder 0, 0
  // Predicated region
  $region14: #{rnn_forward.3} parent=0 // pred_check
    %p15 = pneg %p14
  $region15: #{rnn_forward.3} parent=0 // pred_check_branch
    %17 = sbr.rel (%p15) target = $region17
  $region16: #{rnn_forward.3} parent=0 // pred_region
    %18 = vst [vmem:[#allocation2] sm:$0xff] 0.0
  $region17: #{rnn_forward.3} parent=0 // pred_fallthru
    _
  %v19 = vld [vmem:[#allocation2] sm:$0xff]
  %v20 = vld [vmem:[%s0] sm:$0xff]
  %v21 = vld [vmem:[%s1] sm:$0xff]
  %v22 = vld [vmem:[%s1 + $0x8] sm:$0xff]
  %v23 = vld [vmem:[%s1 + $0x10] sm:$0xff]
  %v24 = vld [vmem:[%s1 + $0x18] sm:$0xff]
  %v25 = vld [vmem:[%s1 + $0x20] sm:$0xff]
  %v26 = vld [vmem:[%s1 + $0x28] sm:$0xff]
  %v27 = vld [vmem:[%s1 + $0x30] sm:$0xff]
  %v28 = vld [vmem:[%s1 + $0x38] sm:$0xff]
  %v29 = vld [vmem:[%s1 + $0x40] sm:$0xff]
  %v30 = vld [vmem:[%s1 + $0x48] sm:$0xff]
  %v31 = vld [vmem:[%s1 + $0x50] sm:$0xff]
  %v32 = vld [vmem:[%s1 + $0x58] sm:$0xff]
  %v33 = vld [vmem:[%s1 + $0x60] sm:$0xff]
  %v34 = vld [vmem:[%s1 + $0x68] sm:$0xff]
  %v35 = vld [vmem:[%s1 + $0x70] sm:$0xff]
  %v36 = vld [vmem:[%s1 + $0x78] sm:$0xff]
  %37 = vmatprep.subr.mxu0 0.0
  %38 = vmatpush1.msra.mxu0 %v21
  %39 = vmatprep.subr.mxu0 0.0
  %40 = vmatpush1.msra.mxu0 %v22
  %41 = vmatprep.subr.mxu0 0.0
  %42 = vmatpush1.msra.mxu0 %v23
  %43 = vmatprep.subr.mxu0 0.0
  %44 = vmatpush1.msra.mxu0 %v24
  %45 = vmatprep.subr.mxu0 0.0
  %46 = vmatpush1.msra.mxu0 %v25
  %47 = vmatprep.subr.mxu0 0.0
  %48 = vmatpush1.msra.mxu0 %v26
  %49 = vmatprep.subr.mxu0 0.0
  %50 = vmatpush1.msra.mxu0 %v27
  %51 = vmatprep.subr.mxu0 0.0
  %52 = vmatpush1.msra.mxu0 %v28
  %53 = vmatprep.subr.mxu0 0.0
  %54 = vmatpush1.msra.mxu0 %v29
  %55 = vmatprep.subr.mxu0 0.0
  %56 = vmatpush1.msra.mxu0 %v30
  %57 = vmatprep.subr.mxu0 0.0
  %58 = vmatpush1.msra.mxu0 %v31
  %59 = vmatprep.subr.mxu0 0.0
  %60 = vmatpush1.msra.mxu0 %v32
  %61 = vmatprep.subr.mxu0 0.0
  %62 = vmatpush1.msra.mxu0 %v33
  %63 = vmatprep.subr.mxu0 0.0
  %64 = vmatpush1.msra.mxu0 %v34
  %65 = vmatprep.subr.mxu0 0.0
  %66 = vmatpush1.msra.mxu0 %v35
  %67 = vmatprep.subr.mxu0 0.0
  %68 = vmatpush1.msra.mxu0 %v36
  %69 = vmatprep.subr.mxu0 0.0
  %70 = vmatpush1.msra.mxu0 0.0
  %71 = vmatprep.subr.mxu0 0.0
  %72 = vmatpush1.msra.mxu0 0.0
  %73 = vmatprep.subr.mxu0 0.0
  %74 = vmatpush1.msra.mxu0 0.0
  %75 = vmatprep.subr.mxu0 0.0
  %76 = vmatpush1.msra.mxu0 0.0
  %77 = vmatprep.subr.mxu0 0.0
  %78 = vmatpush1.msra.mxu0 0.0
  %79 = vmatprep.subr.mxu0 0.0
  %80 = vmatpush1.msra.mxu0 0.0
  %81 = vmatprep.subr.mxu0 0.0
  %82 = vmatpush1.msra.mxu0 0.0
  %83 = vmatprep.subr.mxu0 0.0
  %84 = vmatpush1.msra.mxu0 0.0
  %85 = vmatprep.subr.mxu0 0.0
  %86 = vmatpush1.msra.mxu0 0.0
  %87 = vmatprep.subr.mxu0 0.0
  %88 = vmatpush1.msra.mxu0 0.0
  %89 = vmatprep.subr.mxu0 0.0
  %90 = vmatpush1.msra.mxu0 0.0
  %91 = vmatprep.subr.mxu0 0.0
  %92 = vmatpush1.msra.mxu0 0.0
  %93 = vmatprep.subr.mxu0 0.0
  %94 = vmatpush1.msra.mxu0 0.0
  %95 = vmatprep.subr.mxu0 0.0
  %96 = vmatpush1.msra.mxu0 0.0
  %97 = vmatprep.subr.mxu0 0.0
  %98 = vmatpush1.msra.mxu0 0.0
  %99 = vmatprep.subr.mxu0 0.0
  %100 = vmatpush1.msra.mxu0 0.0
  %101 = vmatprep.mubr.f32.mxu0 0.0
  %102 = vmatmul.mubr.f32.gmra.mrb[0].mxu0 %v19
  %v103 = vpop.f32.mrb[0].mxu0
  %v104 = vadd.f32 0.0, %v103
  %v105 = vpop.f32.mrb[0].mxu0
  %106 = vdwg.mxu0
  %v107 = vadd.f32 %v20, %v104
  %v108 = vtanh.pop %v107
  %109 = vst [vmem:[#allocation3] sm:$0xff] %v108
  %s110 = scalar_lea.vmem %s0, 8
  %v111 = vld [vmem:[%s110] sm:$0xff]
  %v112 = vld [vmem:[%s1] sm:$0xff]
  %v113 = vld [vmem:[%s1 + $0x8] sm:$0xff]
  %v114 = vld [vmem:[%s1 + $0x10] sm:$0xff]
  %v115 = vld [vmem:[%s1 + $0x18] sm:$0xff]
  %v116 = vld [vmem:[%s1 + $0x20] sm:$0xff]
  %v117 = vld [vmem:[%s1 + $0x28] sm:$0xff]
  %v118 = vld [vmem:[%s1 + $0x30] sm:$0xff]
  %v119 = vld [vmem:[%s1 + $0x38] sm:$0xff]
  %v120 = vld [vmem:[%s1 + $0x40] sm:$0xff]
  %v121 = vld [vmem:[%s1 + $0x48] sm:$0xff]
  %v122 = vld [vmem:[%s1 + $0x50] sm:$0xff]
  %v123 = vld [vmem:[%s1 + $0x58] sm:$0xff]
  %v124 = vld [vmem:[%s1 + $0x60] sm:$0xff]
  %v125 = vld [vmem:[%s1 + $0x68] sm:$0xff]
  %v126 = vld [vmem:[%s1 + $0x70] sm:$0xff]
  %v127 = vld [vmem:[%s1 + $0x78] sm:$0xff]
  %128 = vmatprep.subr.mxu0 0.0
  %129 = vmatpush1.msra.mxu0 %v112
  %130 = vmatprep.subr.mxu0 0.0
  %131 = vmatpush1.msra.mxu0 %v113
  %132 = vmatprep.subr.mxu0 0.0
  %133 = vmatpush1.msra.mxu0 %v114
  %134 = vmatprep.subr.mxu0 0.0
  %135 = vmatpush1.msra.mxu0 %v115
  %136 = vmatprep.subr.mxu0 0.0
  %137 = vmatpush1.msra.mxu0 %v116
  %138 = vmatprep.subr.mxu0 0.0
  %139 = vmatpush1.msra.mxu0 %v117
  %140 = vmatprep.subr.mxu0 0.0
  %141 = vmatpush1.msra.mxu0 %v118
  %142 = vmatprep.subr.mxu0 0.0
  %143 = vmatpush1.msra.mxu0 %v119
  %144 = vmatprep.subr.mxu0 0.0
  %145 = vmatpush1.msra.mxu0 %v120
  %146 = vmatprep.subr.mxu0 0.0
  %147 = vmatpush1.msra.mxu0 %v121
  %148 = vmatprep.subr.mxu0 0.0
  %149 = vmatpush1.msra.mxu0 %v122
  %150 = vmatprep.subr.mxu0 0.0
  %151 = vmatpush1.msra.mxu0 %v123
  %152 = vmatprep.subr.mxu0 0.0
  %153 = vmatpush1.msra.mxu0 %v124
  %154 = vmatprep.subr.mxu0 0.0
  %155 = vmatpush1.msra.mxu0 %v125
  %156 = vmatprep.subr.mxu0 0.0
  %157 = vmatpush1.msra.mxu0 %v126
  %158 = vmatprep.subr.mxu0 0.0
  %159 = vmatpush1.msra.mxu0 %v127
  %160 = vmatprep.subr.mxu0 0.0
  %161 = vmatpush1.msra.mxu0 0.0
  %162 = vmatprep.subr.mxu0 0.0
  %163 = vmatpush1.msra.mxu0 0.0
  %164 = vmatprep.subr.mxu0 0.0
  %165 = vmatpush1.msra.mxu0 0.0
  %166 = vmatprep.subr.mxu0 0.0
  %167 = vmatpush1.msra.mxu0 0.0
  %168 = vmatprep.subr.mxu0 0.0
  %169 = vmatpush1.msra.mxu0 0.0
  %170 = vmatprep.subr.mxu0 0.0
  %171 = vmatpush1.msra.mxu0 0.0
  %172 = vmatprep.subr.mxu0 0.0
  %173 = vmatpush1.msra.mxu0 0.0
  %174 = vmatprep.subr.mxu0 0.0
  %175 = vmatpush1.msra.mxu0 0.0
  %176 = vmatprep.subr.mxu0 0.0
  %177 = vmatpush1.msra.mxu0 0.0
  %178 = vmatprep.subr.mxu0 0.0
  %179 = vmatpush1.msra.mxu0 0.0
  %180 = vmatprep.subr.mxu0 0.0
  %181 = vmatpush1.msra.mxu0 0.0
  %182 = vmatprep.subr.mxu0 0.0
  %183 = vmatpush1.msra.mxu0 0.0
  %184 = vmatprep.subr.mxu0 0.0
  %185 = vmatpush1.msra.mxu0 0.0
  %186 = vmatprep.subr.mxu0 0.0
  %187 = vmatpush1.msra.mxu0 0.0
  %188 = vmatprep.subr.mxu0 0.0
  %189 = vmatpush1.msra.mxu0 0.0
  %190 = vmatprep.subr.mxu0 0.0
  %191 = vmatpush1.msra.mxu0 0.0
  %192 = vmatprep.mubr.f32.mxu0 0.0
  %193 = vmatmul.mubr.f32.gmra.mrb[0].mxu0 %v108
  %v194 = vpop.f32.mrb[0].mxu0
  %v195 = vadd.f32 0.0, %v194
  %v196 = vpop.f32.mrb[0].mxu0
  %197 = vdwg.mxu0
  %v198 = vadd.f32 %v111, %v195
  %v199 = vtanh.pop %v198
  %s200 = scalar_lea.vmem [#allocation3], 8
  %201 = vst [vmem:[%s200] sm:$0xff] %v199
  %s202 = scalar_lea.vmem %s0, 16
  %v203 = vld [vmem:[%s202] sm:$0xff]
  %v204 = vld [vmem:[%s1] sm:$0xff]
  %v205 = vld [vmem:[%s1 + $0x8] sm:$0xff]
  %v206 = vld [vmem:[%s1 + $0x10] sm:$0xff]
  %v207 = vld [vmem:[%s1 + $0x18] sm:$0xff]
  %v208 = vld [vmem:[%s1 + $0x20] sm:$0xff]
  %v209 = vld [vmem:[%s1 + $0x28] sm:$0xff]
  %v210 = vld [vmem:[%s1 + $0x30] sm:$0xff]
  %v211 = vld [vmem:[%s1 + $0x38] sm:$0xff]
  %v212 = vld [vmem:[%s1 + $0x40] sm:$0xff]
  %v213 = vld [vmem:[%s1 + $0x48] sm:$0xff]
  %v214 = vld [vmem:[%s1 + $0x50] sm:$0xff]
  %v215 = vld [vmem:[%s1 + $0x58] sm:$0xff]
  %v216 = vld [vmem:[%s1 + $0x60] sm:$0xff]
  %v217 = vld [vmem:[%s1 + $0x68] sm:$0xff]
  %v218 = vld [vmem:[%s1 + $0x70] sm:$0xff]
  %v219 = vld [vmem:[%s1 + $0x78] sm:$0xff]
  %220 = vmatprep.subr.mxu0 0.0
  %221 = vmatpush1.msra.mxu0 %v204
  %222 = vmatprep.subr.mxu0 0.0
  %223 = vmatpush1.msra.mxu0 %v205
  %224 = vmatprep.subr.mxu0 0.0
  %225 = vmatpush1.msra.mxu0 %v206
  %226 = vmatprep.subr.mxu0 0.0
  %227 = vmatpush1.msra.mxu0 %v207
  %228 = vmatprep.subr.mxu0 0.0
  %229 = vmatpush1.msra.mxu0 %v208
  %230 = vmatprep.subr.mxu0 0.0
  %231 = vmatpush1.msra.mxu0 %v209
  %232 = vmatprep.subr.mxu0 0.0
  %233 = vmatpush1.msra.mxu0 %v210
  %234 = vmatprep.subr.mxu0 0.0
  %235 = vmatpush1.msra.mxu0 %v211
  %236 = vmatprep.subr.mxu0 0.0
  %237 = vmatpush1.msra.mxu0 %v212
  %238 = vmatprep.subr.mxu0 0.0
  %239 = vmatpush1.msra.mxu0 %v213
  %240 = vmatprep.subr.mxu0 0.0
  %241 = vmatpush1.msra.mxu0 %v214
  %242 = vmatprep.subr.mxu0 0.0
  %243 = vmatpush1.msra.mxu0 %v215
  %244 = vmatprep.subr.mxu0 0.0
  %245 = vmatpush1.msra.mxu0 %v216
  %246 = vmatprep.subr.mxu0 0.0
  %247 = vmatpush1.msra.mxu0 %v217
  %248 = vmatprep.subr.mxu0 0.0
  %249 = vmatpush1.msra.mxu0 %v218
  %250 = vmatprep.subr.mxu0 0.0
  %251 = vmatpush1.msra.mxu0 %v219
  %252 = vmatprep.subr.mxu0 0.0
  %253 = vmatpush1.msra.mxu0 0.0
  %254 = vmatprep.subr.mxu0 0.0
  %255 = vmatpush1.msra.mxu0 0.0
  %256 = vmatprep.subr.mxu0 0.0
  %257 = vmatpush1.msra.mxu0 0.0
  %258 = vmatprep.subr.mxu0 0.0
  %259 = vmatpush1.msra.mxu0 0.0
  %260 = vmatprep.subr.mxu0 0.0
  %261 = vmatpush1.msra.mxu0 0.0
  %262 = vmatprep.subr.mxu0 0.0
  %263 = vmatpush1.msra.mxu0 0.0
  %264 = vmatprep.subr.mxu0 0.0
  %265 = vmatpush1.msra.mxu0 0.0
  %266 = vmatprep.subr.mxu0 0.0
  %267 = vmatpush1.msra.mxu0 0.0
  %268 = vmatprep.subr.mxu0 0.0
  %269 = vmatpush1.msra.mxu0 0.0
  %270 = vmatprep.subr.mxu0 0.0
  %271 = vmatpush1.msra.mxu0 0.0
  %272 = vmatprep.subr.mxu0 0.0
  %273 = vmatpush1.msra.mxu0 0.0
  %274 = vmatprep.subr.mxu0 0.0
  %275 = vmatpush1.msra.mxu0 0.0
  %276 = vmatprep.subr.mxu0 0.0
  %277 = vmatpush1.msra.mxu0 0.0
  %278 = vmatprep.subr.mxu0 0.0
  %279 = vmatpush1.msra.mxu0 0.0
  %280 = vmatprep.subr.mxu0 0.0
  %281 = vmatpush1.msra.mxu0 0.0
  %282 = vmatprep.subr.mxu0 0.0
  %283 = vmatpush1.msra.mxu0 0.0
  %284 = vmatprep.mubr.f32.mxu0 0.0
  %285 = vmatmul.mubr.f32.gmra.mrb[0].mxu0 %v199
  %v286 = vpop.f32.mrb[0].mxu0
  %v287 = vadd.f32 0.0, %v286
  %v288 = vpop.f32.mrb[0].mxu0
  %289 = vdwg.mxu0
  %v290 = vadd.f32 %v203, %v287
  %v291 = vtanh.pop %v290
  %s292 = scalar_lea.vmem [#allocation3], 16
  %293 = vst [vmem:[%s292] sm:$0xff] %v291
  %s294 = scalar_lea.vmem %s0, 24
  %v295 = vld [vmem:[%s294] sm:$0xff]
  %v296 = vld [vmem:[%s1] sm:$0xff]
  %v297 = vld [vmem:[%s1 + $0x8] sm:$0xff]
  %v298 = vld [vmem:[%s1 + $0x10] sm:$0xff]
  %v299 = vld [vmem:[%s1 + $0x18] sm:$0xff]
  %v300 = vld [vmem:[%s1 + $0x20] sm:$0xff]
  %v301 = vld [vmem:[%s1 + $0x28] sm:$0xff]
  %v302 = vld [vmem:[%s1 + $0x30] sm:$0xff]
  %v303 = vld [vmem:[%s1 + $0x38] sm:$0xff]
  %v304 = vld [vmem:[%s1 + $0x40] sm:$0xff]
  %v305 = vld [vmem:[%s1 + $0x48] sm:$0xff]
  %v306 = vld [vmem:[%s1 + $0x50] sm:$0xff]
  %v307 = vld [vmem:[%s1 + $0x58] sm:$0xff]
  %v308 = vld [vmem:[%s1 + $0x60] sm:$0xff]
  %v309 = vld [vmem:[%s1 + $0x68] sm:$0xff]
  %v310 = vld [vmem:[%s1 + $0x70] sm:$0xff]
  %v311 = vld [vmem:[%s1 + $0x78] sm:$0xff]
  %312 = vmatprep.subr.mxu0 0.0
  %313 = vmatpush1.msra.mxu0 %v296
  %314 = vmatprep.subr.mxu0 0.0
  %315 = vmatpush1.msra.mxu0 %v297
  %316 = vmatprep.subr.mxu0 0.0
  %317 = vmatpush1.msra.mxu0 %v298
  %318 = vmatprep.subr.mxu0 0.0
  %319 = vmatpush1.msra.mxu0 %v299
  %320 = vmatprep.subr.mxu0 0.0
  %321 = vmatpush1.msra.mxu0 %v300
  %322 = vmatprep.subr.mxu0 0.0
  %323 = vmatpush1.msra.mxu0 %v301
  %324 = vmatprep.subr.mxu0 0.0
  %325 = vmatpush1.msra.mxu0 %v302
  %326 = vmatprep.subr.mxu0 0.0
  %327 = vmatpush1.msra.mxu0 %v303
  %328 = vmatprep.subr.mxu0 0.0
  %329 = vmatpush1.msra.mxu0 %v304
  %330 = vmatprep.subr.mxu0 0.0
  %331 = vmatpush1.msra.mxu0 %v305
  %332 = vmatprep.subr.mxu0 0.0
  %333 = vmatpush1.msra.mxu0 %v306
  %334 = vmatprep.subr.mxu0 0.0
  %335 = vmatpush1.msra.mxu0 %v307
  %336 = vmatprep.subr.mxu0 0.0
  %337 = vmatpush1.msra.mxu0 %v308
  %338 = vmatprep.subr.mxu0 0.0
  %339 = vmatpush1.msra.mxu0 %v309
  %340 = vmatprep.subr.mxu0 0.0
  %341 = vmatpush1.msra.mxu0 %v310
  %342 = vmatprep.subr.mxu0 0.0
  %343 = vmatpush1.msra.mxu0 %v311
  %344 = vmatprep.subr.mxu0 0.0
  %345 = vmatpush1.msra.mxu0 0.0
  %346 = vmatprep.subr.mxu0 0.0
  %347 = vmatpush1.msra.mxu0 0.0
  %348 = vmatprep.subr.mxu0 0.0
  %349 = vmatpush1.msra.mxu0 0.0
  %350 = vmatprep.subr.mxu0 0.0
  %351 = vmatpush1.msra.mxu0 0.0
  %352 = vmatprep.subr.mxu0 0.0
  %353 = vmatpush1.msra.mxu0 0.0
  %354 = vmatprep.subr.mxu0 0.0
  %355 = vmatpush1.msra.mxu0 0.0
  %356 = vmatprep.subr.mxu0 0.0
  %357 = vmatpush1.msra.mxu0 0.0
  %358 = vmatprep.subr.mxu0 0.0
  %359 = vmatpush1.msra.mxu0 0.0
  %360 = vmatprep.subr.mxu0 0.0
  %361 = vmatpush1.msra.mxu0 0.0
  %362 = vmatprep.subr.mxu0 0.0
  %363 = vmatpush1.msra.mxu0 0.0
  %364 = vmatprep.subr.mxu0 0.0
  %365 = vmatpush1.msra.mxu0 0.0
  %366 = vmatprep.subr.mxu0 0.0
  %367 = vmatpush1.msra.mxu0 0.0
  %368 = vmatprep.subr.mxu0 0.0
  %369 = vmatpush1.msra.mxu0 0.0
  %370 = vmatprep.subr.mxu0 0.0
  %371 = vmatpush1.msra.mxu0 0.0
  %372 = vmatprep.subr.mxu0 0.0
  %373 = vmatpush1.msra.mxu0 0.0
  %374 = vmatprep.subr.mxu0 0.0
  %375 = vmatpush1.msra.mxu0 0.0
  %376 = vmatprep.mubr.f32.mxu0 0.0
  %377 = vmatmul.mubr.f32.gmra.mrb[0].mxu0 %v291
  %v378 = vpop.f32.mrb[0].mxu0
  %v379 = vadd.f32 0.0, %v378
  %v380 = vpop.f32.mrb[0].mxu0
  %381 = vdwg.mxu0
  %v382 = vadd.f32 %v295, %v379
  %v383 = vtanh.pop %v382
  %s384 = scalar_lea.vmem [#allocation3], 24
  %385 = vst [vmem:[%s384] sm:$0xff] %v383
  %s386 = scalar_lea.vmem %s0, 32
  %v387 = vld [vmem:[%s386] sm:$0xff]
  %v388 = vld [vmem:[%s1] sm:$0xff]
  %v389 = vld [vmem:[%s1 + $0x8] sm:$0xff]
  %v390 = vld [vmem:[%s1 + $0x10] sm:$0xff]
  %v391 = vld [vmem:[%s1 + $0x18] sm:$0xff]
  %v392 = vld [vmem:[%s1 + $0x20] sm:$0xff]
  %v393 = vld [vmem:[%s1 + $0x28] sm:$0xff]
  %v394 = vld [vmem:[%s1 + $0x30] sm:$0xff]
  %v395 = vld [vmem:[%s1 + $0x38] sm:$0xff]
  %v396 = vld [vmem:[%s1 + $0x40] sm:$0xff]
  %v397 = vld [vmem:[%s1 + $0x48] sm:$0xff]
  %v398 = vld [vmem:[%s1 + $0x50] sm:$0xff]
  %v399 = vld [vmem:[%s1 + $0x58] sm:$0xff]
  %v400 = vld [vmem:[%s1 + $0x60] sm:$0xff]
  %v401 = vld [vmem:[%s1 + $0x68] sm:$0xff]
  %v402 = vld [vmem:[%s1 + $0x70] sm:$0xff]
  %v403 = vld [vmem:[%s1 + $0x78] sm:$0xff]
  %404 = vmatprep.subr.mxu0 0.0
  %405 = vmatpush1.msra.mxu0 %v388
  %406 = vmatprep.subr.mxu0 0.0
  %407 = vmatpush1.msra.mxu0 %v389
  %408 = vmatprep.subr.mxu0 0.0
  %409 = vmatpush1.msra.mxu0 %v390
  %410 = vmatprep.subr.mxu0 0.0
  %411 = vmatpush1.msra.mxu0 %v391
  %412 = vmatprep.subr.mxu0 0.0
  %413 = vmatpush1.msra.mxu0 %v392
  %414 = vmatprep.subr.mxu0 0.0
  %415 = vmatpush1.msra.mxu0 %v393
  %416 = vmatprep.subr.mxu0 0.0
  %417 = vmatpush1.msra.mxu0 %v394
  %418 = vmatprep.subr.mxu0 0.0
  %419 = vmatpush1.msra.mxu0 %v395
  %420 = vmatprep.subr.mxu0 0.0
  %421 = vmatpush1.msra.mxu0 %v396
  %422 = vmatprep.subr.mxu0 0.0
  %423 = vmatpush1.msra.mxu0 %v397
  %424 = vmatprep.subr.mxu0 0.0
  %425 = vmatpush1.msra.mxu0 %v398
  %426 = vmatprep.subr.mxu0 0.0
  %427 = vmatpush1.msra.mxu0 %v399
  %428 = vmatprep.subr.mxu0 0.0
  %429 = vmatpush1.msra.mxu0 %v400
  %430 = vmatprep.subr.mxu0 0.0
  %431 = vmatpush1.msra.mxu0 %v401
  %432 = vmatprep.subr.mxu0 0.0
  %433 = vmatpush1.msra.mxu0 %v402
  %434 = vmatprep.subr.mxu0 0.0
  %435 = vmatpush1.msra.mxu0 %v403
  %436 = vmatprep.subr.mxu0 0.0
  %437 = vmatpush1.msra.mxu0 0.0
  %438 = vmatprep.subr.mxu0 0.0
  %439 = vmatpush1.msra.mxu0 0.0
  %440 = vmatprep.subr.mxu0 0.0
  %441 = vmatpush1.msra.mxu0 0.0
  %442 = vmatprep.subr.mxu0 0.0
  %443 = vmatpush1.msra.mxu0 0.0
  %444 = vmatprep.subr.mxu0 0.0
  %445 = vmatpush1.msra.mxu0 0.0
  %446 = vmatprep.subr.mxu0 0.0
  %447 = vmatpush1.msra.mxu0 0.0
  %448 = vmatprep.subr.mxu0 0.0
  %449 = vmatpush1.msra.mxu0 0.0
  %450 = vmatprep.subr.mxu0 0.0
  %451 = vmatpush1.msra.mxu0 0.0
  %452 = vmatprep.subr.mxu0 0.0
  %453 = vmatpush1.msra.mxu0 0.0
  %454 = vmatprep.subr.mxu0 0.0
  %455 = vmatpush1.msra.mxu0 0.0
  %456 = vmatprep.subr.mxu0 0.0
  %457 = vmatpush1.msra.mxu0 0.0
  %458 = vmatprep.subr.mxu0 0.0
  %459 = vmatpush1.msra.mxu0 0.0
  %460 = vmatprep.subr.mxu0 0.0
  %461 = vmatpush1.msra.mxu0 0.0
  %462 = vmatprep.subr.mxu0 0.0
  %463 = vmatpush1.msra.mxu0 0.0
  %464 = vmatprep.subr.mxu0 0.0
  %465 = vmatpush1.msra.mxu0 0.0
  %466 = vmatprep.subr.mxu0 0.0
  %467 = vmatpush1.msra.mxu0 0.0
  %468 = vmatprep.mubr.f32.mxu0 0.0
  %469 = vmatmul.mubr.f32.gmra.mrb[0].mxu0 %v383
  %v470 = vpop.f32.mrb[0].mxu0
  %v471 = vadd.f32 0.0, %v470
  %v472 = vpop.f32.mrb[0].mxu0
  %473 = vdwg.mxu0
  %v474 = vadd.f32 %v387, %v471
  %v475 = vtanh.pop %v474
  %s476 = scalar_lea.vmem [#allocation3], 32
  %477 = vst [vmem:[%s476] sm:$0xff] %v475
  %s478 = scalar_lea.vmem %s0, 40
  %v479 = vld [vmem:[%s478] sm:$0xff]
  %v480 = vld [vmem:[%s1] sm:$0xff]
  %v481 = vld [vmem:[%s1 + $0x8] sm:$0xff]
  %v482 = vld [vmem:[%s1 + $0x10] sm:$0xff]
  %v483 = vld [vmem:[%s1 + $0x18] sm:$0xff]
  %v484 = vld [vmem:[%s1 + $0x20] sm:$0xff]
  %v485 = vld [vmem:[%s1 + $0x28] sm:$0xff]
  %v486 = vld [vmem:[%s1 + $0x30] sm:$0xff]
  %v487 = vld [vmem:[%s1 + $0x38] sm:$0xff]
  %v488 = vld [vmem:[%s1 + $0x40] sm:$0xff]
  %v489 = vld [vmem:[%s1 + $0x48] sm:$0xff]
  %v490 = vld [vmem:[%s1 + $0x50] sm:$0xff]
  %v491 = vld [vmem:[%s1 + $0x58] sm:$0xff]
  %v492 = vld [vmem:[%s1 + $0x60] sm:$0xff]
  %v493 = vld [vmem:[%s1 + $0x68] sm:$0xff]
  %v494 = vld [vmem:[%s1 + $0x70] sm:$0xff]
  %v495 = vld [vmem:[%s1 + $0x78] sm:$0xff]
  %496 = vmatprep.subr.mxu0 0.0
  %497 = vmatpush1.msra.mxu0 %v480
  %498 = vmatprep.subr.mxu0 0.0
  %499 = vmatpush1.msra.mxu0 %v481
  %500 = vmatprep.subr.mxu0 0.0
  %501 = vmatpush1.msra.mxu0 %v482
  %502 = vmatprep.subr.mxu0 0.0
  %503 = vmatpush1.msra.mxu0 %v483
  %504 = vmatprep.subr.mxu0 0.0
  %505 = vmatpush1.msra.mxu0 %v484
  %506 = vmatprep.subr.mxu0 0.0
  %507 = vmatpush1.msra.mxu0 %v485
  %508 = vmatprep.subr.mxu0 0.0
  %509 = vmatpush1.msra.mxu0 %v486
  %510 = vmatprep.subr.mxu0 0.0
  %511 = vmatpush1.msra.mxu0 %v487
  %512 = vmatprep.subr.mxu0 0.0
  %513 = vmatpush1.msra.mxu0 %v488
  %514 = vmatprep.subr.mxu0 0.0
  %515 = vmatpush1.msra.mxu0 %v489
  %516 = vmatprep.subr.mxu0 0.0
  %517 = vmatpush1.msra.mxu0 %v490
  %518 = vmatprep.subr.mxu0 0.0
  %519 = vmatpush1.msra.mxu0 %v491
  %520 = vmatprep.subr.mxu0 0.0
  %521 = vmatpush1.msra.mxu0 %v492
  %522 = vmatprep.subr.mxu0 0.0
  %523 = vmatpush1.msra.mxu0 %v493
  %524 = vmatprep.subr.mxu0 0.0
  %525 = vmatpush1.msra.mxu0 %v494
  %526 = vmatprep.subr.mxu0 0.0
  %527 = vmatpush1.msra.mxu0 %v495
  %528 = vmatprep.subr.mxu0 0.0
  %529 = vmatpush1.msra.mxu0 0.0
  %530 = vmatprep.subr.mxu0 0.0
  %531 = vmatpush1.msra.mxu0 0.0
  %532 = vmatprep.subr.mxu0 0.0
  %533 = vmatpush1.msra.mxu0 0.0
  %534 = vmatprep.subr.mxu0 0.0
  %535 = vmatpush1.msra.mxu0 0.0
  %536 = vmatprep.subr.mxu0 0.0
  %537 = vmatpush1.msra.mxu0 0.0
  %538 = vmatprep.subr.mxu0 0.0
  %539 = vmatpush1.msra.mxu0 0.0
  %540 = vmatprep.subr.mxu0 0.0
  %541 = vmatpush1.msra.mxu0 0.0
  %542 = vmatprep.subr.mxu0 0.0
  %543 = vmatpush1.msra.mxu0 0.0
  %544 = vmatprep.subr.mxu0 0.0
  %545 = vmatpush1.msra.mxu0 0.0
  %546 = vmatprep.subr.mxu0 0.0
  %547 = vmatpush1.msra.mxu0 0.0
  %548 = vmatprep.subr.mxu0 0.0
  %549 = vmatpush1.msra.mxu0 0.0
  %550 = vmatprep.subr.mxu0 0.0
  %551 = vmatpush1.msra.mxu0 0.0
  %552 = vmatprep.subr.mxu0 0.0
  %553 = vmatpush1.msra.mxu0 0.0
  %554 = vmatprep.subr.mxu0 0.0
  %555 = vmatpush1.msra.mxu0 0.0
  %556 = vmatprep.subr.mxu0 0.0
  %557 = vmatpush1.msra.mxu0 0.0
  %558 = vmatprep.subr.mxu0 0.0
  %559 = vmatpush1.msra.mxu0 0.0
  %560 = vmatprep.mubr.f32.mxu0 0.0
  %561 = vmatmul.mubr.f32.gmra.mrb[0].mxu0 %v475
  %v562 = vpop.f32.mrb[0].mxu0
  %v563 = vadd.f32 0.0, %v562
  %v564 = vpop.f32.mrb[0].mxu0
  %565 = vdwg.mxu0
  %v566 = vadd.f32 %v479, %v563
  %v567 = vtanh.pop %v566
  %s568 = scalar_lea.vmem [#allocation3], 40
  %569 = vst [vmem:[%s568] sm:$0xff] %v567
  %s570 = scalar_lea.vmem %s0, 48
  %v571 = vld [vmem:[%s570] sm:$0xff]
  %v572 = vld [vmem:[%s1] sm:$0xff]
  %v573 = vld [vmem:[%s1 + $0x8] sm:$0xff]
  %v574 = vld [vmem:[%s1 + $0x10] sm:$0xff]
  %v575 = vld [vmem:[%s1 + $0x18] sm:$0xff]
  %v576 = vld [vmem:[%s1 + $0x20] sm:$0xff]
  %v577 = vld [vmem:[%s1 + $0x28] sm:$0xff]
  %v578 = vld [vmem:[%s1 + $0x30] sm:$0xff]
  %v579 = vld [vmem:[%s1 + $0x38] sm:$0xff]
  %v580 = vld [vmem:[%s1 + $0x40] sm:$0xff]
  %v581 = vld [vmem:[%s1 + $0x48] sm:$0xff]
  %v582 = vld [vmem:[%s1 + $0x50] sm:$0xff]
  %v583 = vld [vmem:[%s1 + $0x58] sm:$0xff]
  %v584 = vld [vmem:[%s1 + $0x60] sm:$0xff]
  %v585 = vld [vmem:[%s1 + $0x68] sm:$0xff]
  %v586 = vld [vmem:[%s1 + $0x70] sm:$0xff]
  %v587 = vld [vmem:[%s1 + $0x78] sm:$0xff]
  %588 = vmatprep.subr.mxu0 0.0
  %589 = vmatpush1.msra.mxu0 %v572
  %590 = vmatprep.subr.mxu0 0.0
  %591 = vmatpush1.msra.mxu0 %v573
  %592 = vmatprep.subr.mxu0 0.0
  %593 = vmatpush1.msra.mxu0 %v574
  %594 = vmatprep.subr.mxu0 0.0
  %595 = vmatpush1.msra.mxu0 %v575
  %596 = vmatprep.subr.mxu0 0.0
  %597 = vmatpush1.msra.mxu0 %v576
  %598 = vmatprep.subr.mxu0 0.0
  %599 = vmatpush1.msra.mxu0 %v577
  %600 = vmatprep.subr.mxu0 0.0
  %601 = vmatpush1.msra.mxu0 %v578
  %602 = vmatprep.subr.mxu0 0.0
  %603 = vmatpush1.msra.mxu0 %v579
  %604 = vmatprep.subr.mxu0 0.0
  %605 = vmatpush1.msra.mxu0 %v580
  %606 = vmatprep.subr.mxu0 0.0
  %607 = vmatpush1.msra.mxu0 %v581
  %608 = vmatprep.subr.mxu0 0.0
  %609 = vmatpush1.msra.mxu0 %v582
  %610 = vmatprep.subr.mxu0 0.0
  %611 = vmatpush1.msra.mxu0 %v583
  %612 = vmatprep.subr.mxu0 0.0
  %613 = vmatpush1.msra.mxu0 %v584
  %614 = vmatprep.subr.mxu0 0.0
  %615 = vmatpush1.msra.mxu0 %v585
  %616 = vmatprep.subr.mxu0 0.0
  %617 = vmatpush1.msra.mxu0 %v586
  %618 = vmatprep.subr.mxu0 0.0
  %619 = vmatpush1.msra.mxu0 %v587
  %620 = vmatprep.subr.mxu0 0.0
  %621 = vmatpush1.msra.mxu0 0.0
  %622 = vmatprep.subr.mxu0 0.0
  %623 = vmatpush1.msra.mxu0 0.0
  %624 = vmatprep.subr.mxu0 0.0
  %625 = vmatpush1.msra.mxu0 0.0
  %626 = vmatprep.subr.mxu0 0.0
  %627 = vmatpush1.msra.mxu0 0.0
  %628 = vmatprep.subr.mxu0 0.0
  %629 = vmatpush1.msra.mxu0 0.0
  %630 = vmatprep.subr.mxu0 0.0
  %631 = vmatpush1.msra.mxu0 0.0
  %632 = vmatprep.subr.mxu0 0.0
  %633 = vmatpush1.msra.mxu0 0.0
  %634 = vmatprep.subr.mxu0 0.0
  %635 = vmatpush1.msra.mxu0 0.0
  %636 = vmatprep.subr.mxu0 0.0
  %637 = vmatpush1.msra.mxu0 0.0
  %638 = vmatprep.subr.mxu0 0.0
  %639 = vmatpush1.msra.mxu0 0.0
  %640 = vmatprep.subr.mxu0 0.0
  %641 = vmatpush1.msra.mxu0 0.0
  %642 = vmatprep.subr.mxu0 0.0
  %643 = vmatpush1.msra.mxu0 0.0
  %644 = vmatprep.subr.mxu0 0.0
  %645 = vmatpush1.msra.mxu0 0.0
  %646 = vmatprep.subr.mxu0 0.0
  %647 = vmatpush1.msra.mxu0 0.0
  %648 = vmatprep.subr.mxu0 0.0
  %649 = vmatpush1.msra.mxu0 0.0
  %650 = vmatprep.subr.mxu0 0.0
  %651 = vmatpush1.msra.mxu0 0.0
  %652 = vmatprep.mubr.f32.mxu0 0.0
  %653 = vmatmul.mubr.f32.gmra.mrb[0].mxu0 %v567
  %v654 = vpop.f32.mrb[0].mxu0
  %v655 = vadd.f32 0.0, %v654
  %v656 = vpop.f32.mrb[0].mxu0
  %657 = vdwg.mxu0
  %v658 = vadd.f32 %v571, %v655
  %v659 = vtanh.pop %v658
  %s660 = scalar_lea.vmem [#allocation3], 48
  %661 = vst [vmem:[%s660] sm:$0xff] %v659
  %s662 = scalar_lea.vmem %s0, 56
  %v663 = vld [vmem:[%s662] sm:$0xff]
  %v664 = vld [vmem:[%s1] sm:$0xff]
  %v665 = vld [vmem:[%s1 + $0x8] sm:$0xff]
  %v666 = vld [vmem:[%s1 + $0x10] sm:$0xff]
  %v667 = vld [vmem:[%s1 + $0x18] sm:$0xff]
  %v668 = vld [vmem:[%s1 + $0x20] sm:$0xff]
  %v669 = vld [vmem:[%s1 + $0x28] sm:$0xff]
  %v670 = vld [vmem:[%s1 + $0x30] sm:$0xff]
  %v671 = vld [vmem:[%s1 + $0x38] sm:$0xff]
  %v672 = vld [vmem:[%s1 + $0x40] sm:$0xff]
  %v673 = vld [vmem:[%s1 + $0x48] sm:$0xff]
  %v674 = vld [vmem:[%s1 + $0x50] sm:$0xff]
  %v675 = vld [vmem:[%s1 + $0x58] sm:$0xff]
  %v676 = vld [vmem:[%s1 + $0x60] sm:$0xff]
  %v677 = vld [vmem:[%s1 + $0x68] sm:$0xff]
  %v678 = vld [vmem:[%s1 + $0x70] sm:$0xff]
  %v679 = vld [vmem:[%s1 + $0x78] sm:$0xff]
  %680 = vmatprep.subr.mxu0 0.0
  %681 = vmatpush1.msra.mxu0 %v664
  %682 = vmatprep.subr.mxu0 0.0
  %683 = vmatpush1.msra.mxu0 %v665
  %684 = vmatprep.subr.mxu0 0.0
  %685 = vmatpush1.msra.mxu0 %v666
  %686 = vmatprep.subr.mxu0 0.0
  %687 = vmatpush1.msra.mxu0 %v667
  %688 = vmatprep.subr.mxu0 0.0
  %689 = vmatpush1.msra.mxu0 %v668
  %690 = vmatprep.subr.mxu0 0.0
  %691 = vmatpush1.msra.mxu0 %v669
  %692 = vmatprep.subr.mxu0 0.0
  %693 = vmatpush1.msra.mxu0 %v670
  %694 = vmatprep.subr.mxu0 0.0
  %695 = vmatpush1.msra.mxu0 %v671
  %696 = vmatprep.subr.mxu0 0.0
  %697 = vmatpush1.msra.mxu0 %v672
  %698 = vmatprep.subr.mxu0 0.0
  %699 = vmatpush1.msra.mxu0 %v673
  %700 = vmatprep.subr.mxu0 0.0
  %701 = vmatpush1.msra.mxu0 %v674
  %702 = vmatprep.subr.mxu0 0.0
  %703 = vmatpush1.msra.mxu0 %v675
  %704 = vmatprep.subr.mxu0 0.0
  %705 = vmatpush1.msra.mxu0 %v676
  %706 = vmatprep.subr.mxu0 0.0
  %707 = vmatpush1.msra.mxu0 %v677
  %708 = vmatprep.subr.mxu0 0.0
  %709 = vmatpush1.msra.mxu0 %v678
  %710 = vmatprep.subr.mxu0 0.0
  %711 = vmatpush1.msra.mxu0 %v679
  %712 = vmatprep.subr.mxu0 0.0
  %713 = vmatpush1.msra.mxu0 0.0
  %714 = vmatprep.subr.mxu0 0.0
  %715 = vmatpush1.msra.mxu0 0.0
  %716 = vmatprep.subr.mxu0 0.0
  %717 = vmatpush1.msra.mxu0 0.0
  %718 = vmatprep.subr.mxu0 0.0
  %719 = vmatpush1.msra.mxu0 0.0
  %720 = vmatprep.subr.mxu0 0.0
  %721 = vmatpush1.msra.mxu0 0.0
  %722 = vmatprep.subr.mxu0 0.0
  %723 = vmatpush1.msra.mxu0 0.0
  %724 = vmatprep.subr.mxu0 0.0
  %725 = vmatpush1.msra.mxu0 0.0
  %726 = vmatprep.subr.mxu0 0.0
  %727 = vmatpush1.msra.mxu0 0.0
  %728 = vmatprep.subr.mxu0 0.0
  %729 = vmatpush1.msra.mxu0 0.0
  %730 = vmatprep.subr.mxu0 0.0
  %731 = vmatpush1.msra.mxu0 0.0
  %732 = vmatprep.subr.mxu0 0.0
  %733 = vmatpush1.msra.mxu0 0.0
  %734 = vmatprep.subr.mxu0 0.0
  %735 = vmatpush1.msra.mxu0 0.0
  %736 = vmatprep.subr.mxu0 0.0
  %737 = vmatpush1.msra.mxu0 0.0
  %738 = vmatprep.subr.mxu0 0.0
  %739 = vmatpush1.msra.mxu0 0.0
  %740 = vmatprep.subr.mxu0 0.0
  %741 = vmatpush1.msra.mxu0 0.0
  %742 = vmatprep.subr.mxu0 0.0
  %743 = vmatpush1.msra.mxu0 0.0
  %744 = vmatprep.mubr.f32.mxu0 0.0
  %745 = vmatmul.mubr.f32.gmra.mrb[0].mxu0 %v659
  %v746 = vpop.f32.mrb[0].mxu0
  %v747 = vadd.f32 0.0, %v746
  %v748 = vpop.f32.mrb[0].mxu0
  %749 = vdwg.mxu0
  %v750 = vadd.f32 %v663, %v747
  %v751 = vtanh.pop %v750
  %s752 = scalar_lea.vmem [#allocation3], 56
  %753 = vst [vmem:[%s752] sm:$0xff] %v751
  %754 = vst [vmem:[#allocation2] sm:$0xff] %v751
  %v755 = vld [vmem:[#allocation3] sm:$0xff]
  %v756 = vld [vmem:[#allocation3 + $0x8] sm:$0xff]
  %v757 = vld [vmem:[#allocation3 + $0x10] sm:$0xff]
  %v758 = vld [vmem:[#allocation3 + $0x18] sm:$0xff]
  %v759 = vld [vmem:[#allocation3 + $0x20] sm:$0xff]
  %v760 = vld [vmem:[#allocation3 + $0x28] sm:$0xff]
  %v761 = vld [vmem:[#allocation3 + $0x30] sm:$0xff]
  %v762 = vld [vmem:[#allocation3 + $0x38] sm:$0xff]
  %v763 = vld [vmem:[%s2] sm:$0x1]
  %v765 = vlaneseq
  %v766 = vshrl.u32 %v765, 7
  %v767 = vsub.s32 0, %v766
  %v768 = vrot.slane %v763, %v767
  %v770 = vmul.f32 %v755, %v768
  %v771 = vmul.f32 %v756, %v768
  %v772 = vmul.f32 %v757, %v768
  %v773 = vmul.f32 %v758, %v768
  %v774 = vmul.f32 %v759, %v768
  %v775 = vmul.f32 %v760, %v768
  %v776 = vmul.f32 %v761, %v768
  %v777 = vmul.f32 %v762, %v768
  %778 = vadd.xlane.f32.xlu0 %v770
  %v779 = vpop.xlane.xlu0 %778
  %780 = vadd.xlane.f32.xlu0 %v771
  %v781 = vpop.xlane.xlu0 %780
  %782 = vadd.xlane.f32.xlu0 %v772
  %v783 = vpop.xlane.xlu0 %782
  %784 = vadd.xlane.f32.xlu0 %v773
  %v785 = vpop.xlane.xlu0 %784
  %786 = vadd.xlane.f32.xlu0 %v774
  %v787 = vpop.xlane.xlu0 %786
  %788 = vadd.xlane.f32.xlu0 %v775
  %v789 = vpop.xlane.xlu0 %788
  %790 = vadd.xlane.f32.xlu0 %v776
  %v791 = vpop.xlane.xlu0 %790
  %792 = vadd.xlane.f32.xlu0 %v777
  %v793 = vpop.xlane.xlu0 %792
  %v802 = vlaneseq
  %v803 = vand.u32 %v802, 127
  %v804 = vlaneseq
  %v805 = vshrl.u32 %v804, 7
  %v806 = vsub.s32 %v803, %v805
  %v807 = vrot.slane %v779, %v806
  %v808 = vlaneseq
  %v809 = vshrl.u32 %v808, 7
  %v810 = vsub.s32 %v803, %v809
  %v811 = vrot.slane %v781, %v810
  %v812 = vlaneseq
  %v813 = vshrl.u32 %v812, 7
  %v814 = vsub.s32 %v803, %v813
  %v815 = vrot.slane %v783, %v814
  %v816 = vlaneseq
  %v817 = vshrl.u32 %v816, 7
  %v818 = vsub.s32 %v803, %v817
  %v819 = vrot.slane %v785, %v818
  %v820 = vlaneseq
  %v821 = vshrl.u32 %v820, 7
  %v822 = vsub.s32 %v803, %v821
  %v823 = vrot.slane %v787, %v822
  %v824 = vlaneseq
  %v825 = vshrl.u32 %v824, 7
  %v826 = vsub.s32 %v803, %v825
  %v827 = vrot.slane %v789, %v826
  %v828 = vlaneseq
  %v829 = vshrl.u32 %v828, 7
  %v830 = vsub.s32 %v803, %v829
  %v831 = vrot.slane %v791, %v830
  %v832 = vlaneseq
  %v833 = vshrl.u32 %v832, 7
  %v834 = vsub.s32 %v803, %v833
  %v835 = vrot.slane %v793, %v834
  %vm836 = vcmask 1041409
  %v837 = vsel %vm836, %v811, %v807
  %vm838 = vcmask 1042434
  %v839 = vsel %vm838, %v815, %v837
  %vm840 = vcmask 1043459
  %v841 = vsel %vm840, %v819, %v839
  %vm842 = vcmask 1044484
  %v843 = vsel %vm842, %v823, %v841
  %vm844 = vcmask 1045509
  %v845 = vsel %vm844, %v827, %v843
  %vm846 = vcmask 1046534
  %v847 = vsel %vm846, %v831, %v845
  %vm848 = vcmask 1047559
  %v849 = vsel %vm848, %v835, %v847
  %vm851 = vcmask 64512
  %852 = vst.msk [vmem:[%s3] sm:$0xff] %vm851, %v849
  // Predicated region
  $region18: #{rnn_forward.3} parent=0 // pred_check
    _
  $region19: #{rnn_forward.3} parent=0 // pred_check_branch
    %854 = sbr.rel (0) target = $region21
  $region20: #{rnn_forward.3} parent=0 // pred_region
    _
  $region21: #{rnn_forward.3} parent=0 // pred_fallthru
    _
  // Predicated region
  $region22: #{rnn_forward.3} parent=0 // pred_check
    _
  $region23: #{rnn_forward.3} parent=0 // pred_check_branch
    %856 = sbr.rel (0) target = $region25
  $region24: #{rnn_forward.3} parent=0 // pred_region
    _
  $region25: #{rnn_forward.3} parent=0 // pred_fallthru
    _

</llo_original>
